<compile_context>
chip_gen: v6e
topology: v6e:2x2x1
jax: 0.10.0
libtpu: 0.0.40
codegen_flags: <defaults>
</compile_context>

<pallas_src>
import functools

import jax
import jax.numpy as jnp
from jax import lax
from jax.experimental import pallas as pl
from jax.experimental.pallas import tpu as pltpu

EPS = 1e-5
_HI = lax.Precision.HIGHEST  # keep f32 matmuls f32-accurate on the MXU


# ------------------------- kernels: flat path (C % 128 != 0) ----------------

def _norm_flat_kernel(x_ref, selr_ref, selb_ref, w_ref, b_ref,
                      y_ref, center_ref, std_ref, *, eps, subtract_last, T, C):
    """x_ref: (TB, T*C) lane-dense block; selectors sel[c, t*C+c2] = (c2==c)."""
    dn = (((1,), (1,)), ((), ()))            # contract last dim with last dim
    x = x_ref[...]                            # (TB, T*C), input dtype
    selr = selr_ref[...]                      # (C, T*C), x.dtype  (reductions)
    selb = selb_ref[...]                      # (C, T*C), f32      (broadcasts)

    # Per-channel mean over T (MXU, f32 accumulation).
    sums = lax.dot_general(x, selr, dn, precision=_HI,
                           preferred_element_type=jnp.float32)        # (TB, C)
    mean_c = sums * (1.0 / T)

    # Centered second pass for the variance (robust when |mean| >> std).
    mean_flat = jnp.dot(mean_c, selb, precision=_HI,
                        preferred_element_type=jnp.float32)           # (TB, T*C)
    d = x.astype(jnp.float32) - mean_flat
    ssq = lax.dot_general(d * d, selb, dn, precision=_HI,
                          preferred_element_type=jnp.float32)         # (TB, C)
    std_c = jnp.sqrt(ssq * (1.0 / T) + eps)
    inv_std_c = 1.0 / std_c                   # exactly consistent with std_c

    w = w_ref[...].astype(jnp.float32)        # (1, C)
    b = b_ref[...].astype(jnp.float32)        # (1, C)
    scale_c = w * inv_std_c                   # (TB, C)
    scale_flat = jnp.dot(scale_c, selb, precision=_HI,
                         preferred_element_type=jnp.float32)          # (TB, T*C)

    if subtract_last:
        center_c = x[:, (T - 1) * C:].astype(jnp.float32)             # (TB, C)
        shift_c = b - center_c * scale_c                              # f32
        shift_flat = jnp.dot(shift_c, selb, precision=_HI,
                             preferred_element_type=jnp.float32)
        y = x.astype(jnp.float32) * scale_flat + shift_flat
    else:
        center_c = mean_c
        b_flat = jnp.dot(b, selb, precision=_HI,
                         preferred_element_type=jnp.float32)          # (1, T*C)
        y = d * scale_flat + b_flat           # reuse centered diff, shift in f32

    y_ref[...] = y.astype(y_ref.dtype)
    center_ref[...] = center_c.astype(center_ref.dtype)
    std_ref[...] = std_c.astype(std_ref.dtype)


def _denorm_flat_kernel(y_ref, center_ref, std_ref, invw_ref, b_ref, selb_ref,
                        x_ref):
    selb = selb_ref[...]                      # (C, T*C) f32
    a_c = std_ref[...] * invw_ref[...]        # (TB, C) * (1, C)
    c_c = center_ref[...] - b_ref[...] * a_c  # (TB, C)
    a_flat = jnp.dot(a_c, selb, precision=_HI,
                     preferred_element_type=jnp.float32)
    c_flat = jnp.dot(c_c, selb, precision=_HI,
                     preferred_element_type=jnp.float32)
    x = y_ref[...].astype(jnp.float32) * a_flat + c_flat
    x_ref[...] = x.astype(x_ref.dtype)


# ------------------------- kernels: blocked path (C % 128 == 0) -------------

def _norm_blocked_kernel(x_ref, w_ref, b_ref, y_ref, center_ref, std_ref, *,
                         eps, subtract_last):
    xf = x_ref[...].astype(jnp.float32)               # (TB, T, C)
    mean = jnp.mean(xf, axis=1, keepdims=True)        # (TB, 1, C)
    d = xf - mean                                     # centered two-pass var
    std = jnp.sqrt(jnp.mean(d * d, axis=1, keepdims=True) + eps)
    inv_std = 1.0 / std
    w = w_ref[...].astype(jnp.float32)                # (1, C)
    b = b_ref[...].astype(jnp.float32)
    scale = w * inv_std                               # (TB, 1, C)
    if subtract_last:
        center = xf[:, -1:, :]
        y = xf * scale + (b - center * scale)
    else:
        center = mean
        y = d * scale + b
    y_ref[...] = y.astype(y_ref.dtype)
    center_ref[...] = center.astype(center_ref.dtype)
    std_ref[...] = std.astype(std_ref.dtype)


def _denorm_blocked_kernel(y_ref, center_ref, std_ref, invw_ref, b_ref, x_ref):
    a = std_ref[...] * invw_ref[...]                  # (TB, 1, C)
    c = center_ref[...] - b_ref[...] * a
    x = y_ref[...].astype(jnp.float32) * a + c
    x_ref[...] = x.astype(x_ref.dtype)


# ----------------------------- tiling / layout helpers ----------------------

def _selector(T, C, dtype):
    """sel[c, t*C + c2] = 1 iff c2 == c; shape (C, T*C)."""
    return jnp.tile(jnp.eye(C, dtype=dtype), (1, T))


def _use_flat_layout(T, C, itemsize):
    if C % 128 == 0:
        return False                                  # already lane dense
    sel_bytes = (4 + itemsize) * C * C * T            # f32 + x.dtype selectors
    return sel_bytes <= (4 << 20)


def _target_step_bytes():
    """Per-step VMEM working-set target, generation aware."""
    try:
        kind = jax.devices()[0].device_kind.lower()
    except Exception:
        kind = ""
    if any(v in kind for v in ("v4", "v5", "v6")):
        return 32 << 20                               # 128 MiB physical VMEM
    return 20 << 20                                   # conservative (v7x: 64 MiB)


def _derive_tiling(B, per_row_elems, itemsize, extra_bytes, target_bytes,
                   sublane_mult=None):
    """Pick a batch tile TB (divisor of B) so the estimated per-step VMEM
    working set fits target_bytes.  Prefers an even grid-step count (megacore
    balance on v7x).  When sublane_mult is set (flat path, TB is the sublane
    dim of a 2-D block) TB must be a multiple of it or equal to B."""
    def est(tb):
        blk = tb * per_row_elems
        # 2x double-buffered input + 2x double-buffered output (input dtype)
        # + ~4 live full-block f32 temporaries inside the kernel body.
        return blk * (4 * itemsize + 4 * 4) + extra_bytes + (1 << 20)

    divs = [d for d in range(1, B + 1) if B % d == 0]
    if sublane_mult is not None:
        divs = [d for d in divs if d % sublane_mult == 0 or d == B]
    fits = [d for d in divs if est(d) <= target_bytes]
    if not fits:
        # TODO(synk): T-tiled two-pass fallback for rows that exceed the
        # per-step VMEM budget; for now take the smallest allowed tile.
        fits = [min(divs)]
    even = [d for d in fits if (B // d) % 2 == 0]
    multi = [d for d in fits if (B // d) >= 2]
    tb = max(even) if even else (max(multi) if multi else max(fits))
    vmem_limit = int(min(max(est(tb) + (4 << 20), 16 << 20), 64 << 20))
    return tb, vmem_limit


def _sublane_mult(itemsize):
    return {4: 8, 2: 16, 1: 32}.get(itemsize, 8)


# ----------------------------------- wrappers --------------------------------

def revin_norm(x, weight, bias, eps=EPS, subtract_last=False):
    """mode='norm': returns (y, center, std).  center is the per-(b, c) mean
    (or x[:, -1:, :] when subtract_last=True) and std = sqrt(var + eps); both
    are reused by revin_denorm.  affine=False corresponds to weight=1, bias=0."""
    B, T, C = x.shape
    isz = x.dtype.itemsize
    w2 = weight.reshape(1, C).astype(jnp.float32)
    b2 = bias.reshape(1, C).astype(jnp.float32)
    target = _target_step_bytes()

    if _use_flat_layout(T, C, isz):
        TC = T * C
        sel_bytes = 2 * (4 + isz) * C * TC
        TB, vmem_limit = _derive_tiling(B, TC, isz, sel_bytes, target,
                                        sublane_mult=_sublane_mult(isz))
        selb = _selector(T, C, jnp.float32)
        selr = selb.astype(x.dtype)
        kernel = functools.partial(_norm_flat_kernel, eps=eps,
                                   subtract_last=subtract_last, T=T, C=C)
        y, center, std = pl.pallas_call(
            kernel,
            out_shape=(
                jax.ShapeDtypeStruct((B, TC), x.dtype),
                jax.ShapeDtypeStruct((B, C), jnp.float32),
                jax.ShapeDtypeStruct((B, C), jnp.float32),
            ),
            grid_spec=pltpu.PrefetchScalarGridSpec(
                num_scalar_prefetch=0,
                grid=(B // TB,),
                in_specs=[
                    pl.BlockSpec((TB, TC), lambda i: (i, 0)),
                    pl.BlockSpec((C, TC), lambda i: (0, 0)),   # selr (fetched once)
                    pl.BlockSpec((C, TC), lambda i: (0, 0)),   # selb (fetched once)
                    pl.BlockSpec((1, C), lambda i: (0, 0)),
                    pl.BlockSpec((1, C), lambda i: (0, 0)),
                ],
                out_specs=[
                    pl.BlockSpec((TB, TC), lambda i: (i, 0)),
                    pl.BlockSpec((TB, C), lambda i: (i, 0)),
                    pl.BlockSpec((TB, C), lambda i: (i, 0)),
                ],
            ),
            compiler_params=pltpu.CompilerParams(
                dimension_semantics=("parallel",),
                vmem_limit_bytes=vmem_limit,
            ),
        )(x.reshape(B, TC), selr, selb, w2, b2)
        return (y.reshape(B, T, C), center.reshape(B, 1, C),
                std.reshape(B, 1, C))

    # Blocked path: C is a multiple of 128, (B, T, C) blocks are lane dense.
    TB, vmem_limit = _derive_tiling(B, T * C, isz, 0, target)
    kernel = functools.partial(_norm_blocked_kernel, eps=eps,
                               subtract_last=subtract_last)
    y, center, std = pl.pallas_call(
        kernel,
        out_shape=(
            jax.ShapeDtypeStruct((B, T, C), x.dtype),
            jax.ShapeDtypeStruct((B, 1, C), jnp.float32),
            jax.ShapeDtypeStruct((B, 1, C), jnp.float32),
        ),
        grid_spec=pltpu.PrefetchScalarGridSpec(
            num_scalar_prefetch=0,
            grid=(B // TB,),
            in_specs=[
                pl.BlockSpec((TB, T, C), lambda i: (i, 0, 0)),
                pl.BlockSpec((1, C), lambda i: (0, 0)),
                pl.BlockSpec((1, C), lambda i: (0, 0)),
            ],
            out_specs=[
                pl.BlockSpec((TB, T, C), lambda i: (i, 0, 0)),
                pl.BlockSpec((TB, 1, C), lambda i: (i, 0, 0)),
                pl.BlockSpec((TB, 1, C), lambda i: (i, 0, 0)),
            ],
        ),
        compiler_params=pltpu.CompilerParams(
            dimension_semantics=("parallel",),
            vmem_limit_bytes=vmem_limit,
        ),
    )(x, w2, b2)
    return y, center, std


def revin_denorm(y, center, std, weight, bias, eps=EPS):
    """mode='denorm': inverse of revin_norm given the stored (center, std)."""
    B, T, C = y.shape
    isz = y.dtype.itemsize
    # Per-channel reciprocal precomputed once in the wrapper (amortized over
    # all grid steps); replaces the per-block divide inside the kernel.
    invw = (1.0 / (weight.astype(jnp.float32) + eps * eps)).reshape(1, C)
    b2 = bias.reshape(1, C).astype(jnp.float32)
    target = _target_step_bytes()

    if _use_flat_layout(T, C, isz):
        TC = T * C
        sel_bytes = 2 * 4 * C * TC
        TB, vmem_limit = _derive_tiling(B, TC, isz, sel_bytes, target,
                                        sublane_mult=_sublane_mult(isz))
        selb = _selector(T, C, jnp.float32)
        x = pl.pallas_call(
            _denorm_flat_kernel,
            out_shape=jax.ShapeDtypeStruct((B, TC), y.dtype),
            grid_spec=pltpu.PrefetchScalarGridSpec(
                num_scalar_prefetch=0,
                grid=(B // TB,),
                in_specs=[
                    pl.BlockSpec((TB, TC), lambda i: (i, 0)),
                    pl.BlockSpec((TB, C), lambda i: (i, 0)),
                    pl.BlockSpec((TB, C), lambda i: (i, 0)),
                    pl.BlockSpec((1, C), lambda i: (0, 0)),
                    pl.BlockSpec((1, C), lambda i: (0, 0)),
                    pl.BlockSpec((C, TC), lambda i: (0, 0)),   # selb (fetched once)
                ],
                out_specs=pl.BlockSpec((TB, TC), lambda i: (i, 0)),
            ),
            compiler_params=pltpu.CompilerParams(
                dimension_semantics=("parallel",),
                vmem_limit_bytes=vmem_limit,
            ),
        )(y.reshape(B, TC),
          center.reshape(B, C).astype(jnp.float32),
          std.reshape(B, C).astype(jnp.float32),
          invw, b2, selb)
        return x.reshape(B, T, C)

    TB, vmem_limit = _derive_tiling(B, T * C, isz, 0, target)
    x = pl.pallas_call(
        _denorm_blocked_kernel,
        out_shape=jax.ShapeDtypeStruct((B, T, C), y.dtype),
        grid_spec=pltpu.PrefetchScalarGridSpec(
            num_scalar_prefetch=0,
            grid=(B // TB,),
            in_specs=[
                pl.BlockSpec((TB, T, C), lambda i: (i, 0, 0)),
                pl.BlockSpec((TB, 1, C), lambda i: (i, 0, 0)),
                pl.BlockSpec((TB, 1, C), lambda i: (i, 0, 0)),
                pl.BlockSpec((1, C), lambda i: (0, 0)),
                pl.BlockSpec((1, C), lambda i: (0, 0)),
            ],
            out_specs=pl.BlockSpec((TB, T, C), lambda i: (i, 0, 0)),
        ),
        compiler_params=pltpu.CompilerParams(
            dimension_semantics=("parallel",),
            vmem_limit_bytes=vmem_limit,
        ),
    )(y, center.reshape(B, 1, C).astype(jnp.float32),
      std.reshape(B, 1, C).astype(jnp.float32), invw, b2)
    return x


# ----------------------------- pure-JAX reference ---------------------------

def _reference_norm(x, weight, bias, eps=EPS, subtract_last=False):
    mean = jnp.mean(x, axis=1, keepdims=True)
    std = jnp.sqrt(jnp.var(x, axis=1, keepdims=True) + eps)  # unbiased=False
    center = x[:, -1:, :] if subtract_last else mean
    y = (x - center) / std * weight + bias
    return y, center, std


def _reference_denorm(y, center, std, weight, bias, eps=EPS):
    return (y - bias) / (weight + eps * eps) * std + center


# ------------------------------------ tests ----------------------------------

def _check(x, w, b, subtract_last, atol, rt_atol):
    y, ctr, std = revin_norm(x, w, b, subtract_last=subtract_last)
    y = jax.block_until_ready(y)
    x_rec = jax.block_until_ready(revin_denorm(y, ctr, std, w, b))

    xf = x.astype(jnp.float32)
    y_ref, c_ref, s_ref = _reference_norm(xf, w, b, subtract_last=subtract_last)
    x_rec_ref = _reference_denorm(y_ref, c_ref, s_ref, w, b)

    assert jnp.allclose(y.astype(jnp.float32), y_ref, atol=atol, rtol=atol), "y"
    assert jnp.allclose(ctr, c_ref, atol=atol, rtol=atol), "center"
    assert jnp.allclose(std, s_ref, atol=atol, rtol=atol), "std"
    assert jnp.allclose(x_rec.astype(jnp.float32), x_rec_ref,
                        atol=rt_atol, rtol=atol), "denorm"
    assert jnp.allclose(x_rec.astype(jnp.float32), xf,
                        atol=rt_atol, rtol=atol), "round trip"


if __name__ == "__main__":
    key = jax.random.PRNGKey(0)
    kx1, kx2, kx3, kw, kb = jax.random.split(key, 5)

    # ---- flat (lane-dense) path: small C, f32, both centering modes --------
    B, T, C = 2, 8, 4
    x = jax.random.normal(kx1, (B, T, C), dtype=jnp.float32) + 3.0
    w = 0.5 + jax.random.uniform(kw, (C,), dtype=jnp.float32)
    b = 0.1 * jax.random.normal(kb, (C,), dtype=jnp.float32)
    _check(x, w, b, subtract_last=False, atol=1e-4, rt_atol=1e-4)
    _check(x, w, b, subtract_last=True, atol=1e-4, rt_atol=1e-4)

    # Default RevIN init (weight=1, bias=0).
    ones = jnp.ones((C,), jnp.float32)
    zeros = jnp.zeros((C,), jnp.float32)
    _check(x, ones, zeros, subtract_last=False, atol=1e-4, rt_atol=1e-4)

    # ---- blocked path: C multiple of 128, f32 ------------------------------
    B2, T2, C2 = 4, 16, 128
    x2 = jax.random.normal(kx2, (B2, T2, C2), dtype=jnp.float32)
    w2 = jnp.ones((C2,), jnp.float32)
    b2 = jnp.zeros((C2,), jnp.float32)
    _check(x2, w2, b2, subtract_last=False, atol=1e-4, rt_atol=1e-4)

    # ---- flat path, bf16 input (loose tolerances) ---------------------------
    B3, T3, C3 = 2, 32, 8
    x3 = jax.random.normal(kx3, (B3, T3, C3), dtype=jnp.bfloat16)
    w3 = jnp.ones((C3,), jnp.float32)
    b3 = jnp.zeros((C3,), jnp.float32)
    _check(x3, w3, b3, subtract_last=False, atol=5e-2, rt_atol=5e-2)

    print("KERNEL_OK")
</pallas_src>

<mosaic_0001>
module attributes {stable_mosaic.version = 11 : i64} {
  func.func @_norm_flat_kernel(%arg0: i32, %arg1: memref<2x32xf32, #tpu.memory_space<vmem>>, %arg2: memref<4x32xf32, #tpu.memory_space<vmem>>, %arg3: memref<4x32xf32, #tpu.memory_space<vmem>>, %arg4: memref<1x4xf32, #tpu.memory_space<vmem>>, %arg5: memref<1x4xf32, #tpu.memory_space<vmem>>, %arg6: memref<2x32xf32, #tpu.memory_space<vmem>>, %arg7: memref<2x4xf32, #tpu.memory_space<vmem>>, %arg8: memref<2x4xf32, #tpu.memory_space<vmem>>) attributes {dimension_semantics = [#tpu.dimension_semantics<parallel>], iteration_bounds = array<i64: 1>, scalar_prefetch = 0 : i64, scratch_operands = 0 : i64, tpu.core_type = #tpu.core_type<tc>, window_params = [{transform_indices = @transform_0, window_bounds = array<i64: 2, 32>}, {pipeline_mode = #tpu.pipeline_mode<synchronous>, transform_indices = @transform_1, window_bounds = array<i64: 4, 32>}, {pipeline_mode = #tpu.pipeline_mode<synchronous>, transform_indices = @transform_2, window_bounds = array<i64: 4, 32>}, {pipeline_mode = #tpu.pipeline_mode<synchronous>, transform_indices = @transform_3, window_bounds = array<i64: 1, 4>}, {pipeline_mode = #tpu.pipeline_mode<synchronous>, transform_indices = @transform_4, window_bounds = array<i64: 1, 4>}, {transform_indices = @transform_5, window_bounds = array<i64: 2, 32>}, {transform_indices = @transform_6, window_bounds = array<i64: 2, 4>}, {transform_indices = @transform_7, window_bounds = array<i64: 2, 4>}]} {
    %c0 = arith.constant 0 : index
    %c0_0 = arith.constant 0 : index
    %0 = vector.load %arg1[%c0, %c0_0] : memref<2x32xf32, #tpu.memory_space<vmem>>, vector<2x32xf32>
    %c0_1 = arith.constant 0 : index
    %c0_2 = arith.constant 0 : index
    %1 = vector.load %arg2[%c0_1, %c0_2] : memref<4x32xf32, #tpu.memory_space<vmem>>, vector<4x32xf32>
    %c0_3 = arith.constant 0 : index
    %c0_4 = arith.constant 0 : index
    %2 = vector.load %arg3[%c0_3, %c0_4] : memref<4x32xf32, #tpu.memory_space<vmem>>, vector<4x32xf32>
    %cst = arith.constant dense<0.000000e+00> : vector<2x4xf32>
    %3 = tpu.matmul %0, %1, %cst {dimension_numbers = #tpu.dot_dimension_numbers<[1], [1], [0], [0], [0, 0, 1, 0], [], []>, precision = #tpu.contract_precision<fp32>} : vector<2x32xf32>, vector<4x32xf32>, vector<2x4xf32> -> vector<2x4xf32>
    %cst_5 = arith.constant 1.250000e-01 : f32
    %4 = vector.broadcast %cst_5 : f32 to vector<2x4xf32>
    %5 = arith.mulf %3, %4 : vector<2x4xf32>
    %cst_6 = arith.constant dense<0.000000e+00> : vector<2x32xf32>
    %6 = tpu.matmul %5, %2, %cst_6 {dimension_numbers = #tpu.dot_dimension_numbers<[1], [0], [0], [1], [0, 0, 1, 1], [], []>, precision = #tpu.contract_precision<fp32>} : vector<2x4xf32>, vector<4x32xf32>, vector<2x32xf32> -> vector<2x32xf32>
    %7 = arith.subf %0, %6 : vector<2x32xf32>
    %8 = arith.mulf %7, %7 : vector<2x32xf32>
    %cst_7 = arith.constant dense<0.000000e+00> : vector<2x4xf32>
    %9 = tpu.matmul %8, %2, %cst_7 {dimension_numbers = #tpu.dot_dimension_numbers<[1], [1], [0], [0], [0, 0, 1, 0], [], []>, precision = #tpu.contract_precision<fp32>} : vector<2x32xf32>, vector<4x32xf32>, vector<2x4xf32> -> vector<2x4xf32>
    %cst_8 = arith.constant 1.250000e-01 : f32
    %10 = vector.broadcast %cst_8 : f32 to vector<2x4xf32>
    %11 = arith.mulf %9, %10 : vector<2x4xf32>
    %cst_9 = arith.constant 9.99999974E-6 : f32
    %12 = vector.broadcast %cst_9 : f32 to vector<2x4xf32>
    %13 = arith.addf %11, %12 : vector<2x4xf32>
    %14 = math.sqrt %13 : vector<2x4xf32>
    %cst_10 = arith.constant 1.000000e+00 : f32
    %15 = vector.broadcast %cst_10 : f32 to vector<2x4xf32>
    %16 = arith.divf %15, %14 : vector<2x4xf32>
    %c0_11 = arith.constant 0 : index
    %c0_12 = arith.constant 0 : index
    %17 = vector.load %arg4[%c0_11, %c0_12] : memref<1x4xf32, #tpu.memory_space<vmem>>, vector<1x4xf32>
    %c0_13 = arith.constant 0 : index
    %c0_14 = arith.constant 0 : index
    %18 = vector.load %arg5[%c0_13, %c0_14] : memref<1x4xf32, #tpu.memory_space<vmem>>, vector<1x4xf32>
    %19 = vector.broadcast %17 : vector<1x4xf32> to vector<2x4xf32>
    %20 = arith.mulf %19, %16 : vector<2x4xf32>
    %cst_15 = arith.constant dense<0.000000e+00> : vector<2x32xf32>
    %21 = tpu.matmul %20, %2, %cst_15 {dimension_numbers = #tpu.dot_dimension_numbers<[1], [0], [0], [1], [0, 0, 1, 1], [], []>, precision = #tpu.contract_precision<fp32>} : vector<2x4xf32>, vector<4x32xf32>, vector<2x32xf32> -> vector<2x32xf32>
    %cst_16 = arith.constant dense<0.000000e+00> : vector<1x32xf32>
    %22 = tpu.matmul %18, %2, %cst_16 {dimension_numbers = #tpu.dot_dimension_numbers<[1], [0], [0], [1], [0, 0, 1, 1], [], []>, precision = #tpu.contract_precision<fp32>} : vector<1x4xf32>, vector<4x32xf32>, vector<1x32xf32> -> vector<1x32xf32>
    %23 = arith.mulf %7, %21 : vector<2x32xf32>
    %24 = vector.broadcast %22 : vector<1x32xf32> to vector<2x32xf32>
    %25 = arith.addf %23, %24 : vector<2x32xf32>
    %c0_17 = arith.constant 0 : index
    %c0_18 = arith.constant 0 : index
    %26 = vector.load %arg6[%c0_17, %c0_18] : memref<2x32xf32, #tpu.memory_space<vmem>>, vector<2x32xf32>
    tpu.vector_store %arg6[%c0_17, %c0_18], %25 {strides = array<i32>} : memref<2x32xf32, #tpu.memory_space<vmem>>, vector<2x32xf32>,
    %c0_19 = arith.constant 0 : index
    %c0_20 = arith.constant 0 : index
    %27 = vector.load %arg7[%c0_19, %c0_20] : memref<2x4xf32, #tpu.memory_space<vmem>>, vector<2x4xf32>
    tpu.vector_store %arg7[%c0_19, %c0_20], %5 {strides = array<i32>} : memref<2x4xf32, #tpu.memory_space<vmem>>, vector<2x4xf32>,
    %c0_21 = arith.constant 0 : index
    %c0_22 = arith.constant 0 : index
    %28 = vector.load %arg8[%c0_21, %c0_22] : memref<2x4xf32, #tpu.memory_space<vmem>>, vector<2x4xf32>
    tpu.vector_store %arg8[%c0_21, %c0_22], %14 {strides = array<i32>} : memref<2x4xf32, #tpu.memory_space<vmem>>, vector<2x4xf32>,
    return
  }
  func.func @transform_0(%arg0: i32) -> (i32, i32) {
    %c0_i32 = arith.constant 0 : i32
    %c0_i32_0 = arith.constant 0 : i32
    return %arg0, %c0_i32 : i32, i32
  }
  func.func @transform_1(%arg0: i32) -> (i32, i32) {
    %c0_i32 = arith.constant 0 : i32
    %c0_i32_0 = arith.constant 0 : i32
    %c0_i32_1 = arith.constant 0 : i32
    return %c0_i32, %c0_i32_0 : i32, i32
  }
  func.func @transform_2(%arg0: i32) -> (i32, i32) {
    %c0_i32 = arith.constant 0 : i32
    %c0_i32_0 = arith.constant 0 : i32
    %c0_i32_1 = arith.constant 0 : i32
    return %c0_i32, %c0_i32_0 : i32, i32
  }
  func.func @transform_3(%arg0: i32) -> (i32, i32) {
    %c0_i32 = arith.constant 0 : i32
    %c0_i32_0 = arith.constant 0 : i32
    %c0_i32_1 = arith.constant 0 : i32
    return %c0_i32, %c0_i32_0 : i32, i32
  }
  func.func @transform_4(%arg0: i32) -> (i32, i32) {
    %c0_i32 = arith.constant 0 : i32
    %c0_i32_0 = arith.constant 0 : i32
    %c0_i32_1 = arith.constant 0 : i32
    return %c0_i32, %c0_i32_0 : i32, i32
  }
  func.func @transform_5(%arg0: i32) -> (i32, i32) {
    %c0_i32 = arith.constant 0 : i32
    %c0_i32_0 = arith.constant 0 : i32
    return %arg0, %c0_i32 : i32, i32
  }
  func.func @transform_6(%arg0: i32) -> (i32, i32) {
    %c0_i32 = arith.constant 0 : i32
    %c0_i32_0 = arith.constant 0 : i32
    return %arg0, %c0_i32 : i32, i32
  }
  func.func @transform_7(%arg0: i32) -> (i32, i32) {
    %c0_i32 = arith.constant 0 : i32
    %c0_i32_0 = arith.constant 0 : i32
    return %arg0, %c0_i32 : i32, i32
  }
}

</mosaic_0001>

<llo_original>
// kernel: tpu_custom_call.1
$region0: #{tpu_custom_call.1}
  #allocation0 [shape = 'u32[]', space=smem, size = 0x4, offset = 0x4, fixed_abs, tag = 'smem constant byte address 0x4 - core index']
  #allocation1 [shape = 'u32[144,128]{1,0:T(1,128)}', space=vmem, size = 0x12000, scoped, tag = 'internal scratch']
  %s0 = inlined_call_operand.hbm [shape: f32[2,32], index: 0, kind: input, shape index: {}]
  %s1 = inlined_call_operand.hbm [shape: f32[4,32], index: 1, kind: input, shape index: {}]
  %s2 = inlined_call_operand.hbm [shape: f32[4,32], index: 2, kind: input, shape index: {}]
  %s3 = inlined_call_operand.vmem [shape: f32[1,4], index: 3, kind: input, shape index: {}]
  %s4 = inlined_call_operand.vmem [shape: f32[1,4], index: 4, kind: input, shape index: {}]
  %s5 = inlined_call_operand.hbm [shape: f32[2,32], index: 5, kind: output, shape index: {0}]
  %s6 = inlined_call_operand.hbm [shape: f32[2,4], index: 6, kind: output, shape index: {1}]
  %s7 = inlined_call_operand.hbm [shape: f32[2,4], index: 7, kind: output, shape index: {2}]
  %8 = xla_tuple %s5, %s6, %s7
  %s9 = sld [smem:[#allocation0]]
  $region58: #{tpu_custom_call.1} parent=0
    _
  %s11 = ssub.s32 1, %s9
  %s12 = scalar_select 0, %s11, %s9
  $region1: #{tpu_custom_call.1} parent=0
    #allocation2 [shape = 'u8[1024]{0}', space=vmem, size = 0x400, scoped, tag = 'input window, operand 0, single buffered']
    #allocation3 [shape = 's32[1]{0}', space=sflag, size = 0x4, scoped, tag = 'scoped memory for tpu_custom_call.1']
    #allocation4 [shape = 's32[1]{0}', space=sflag, size = 0x4, scoped, tag = 'scoped memory for tpu_custom_call.1']
    #allocation5 [shape = 'u8[2048]{0}', space=vmem, size = 0x800, scoped, tag = 'input window, operand 1, single buffered']
    #allocation6 [shape = 's32[1]{0}', space=sflag, size = 0x4, scoped, tag = 'scoped memory for tpu_custom_call.1']
    #allocation7 [shape = 'u8[2048]{0}', space=vmem, size = 0x800, scoped, tag = 'input window, operand 2, single buffered']
    #allocation8 [shape = 'u8[1024]{0}', space=vmem, size = 0x400, scoped, tag = 'output window, operand 0, single buffered']
    #allocation9 [shape = 'u8[1024]{0}', space=vmem, size = 0x400, scoped, tag = 'output window, operand 1, single buffered']
    #allocation10 [shape = 's32[1]{0}', space=sflag, size = 0x4, scoped, tag = 'scoped memory for tpu_custom_call.1']
    #allocation11 [shape = 'u8[1024]{0}', space=vmem, size = 0x400, scoped, tag = 'output window, operand 2, single buffered']
    %13 = vsyncpa [#allocation3], 0
    %14 = vsyncpa [#allocation6], 0
    %15 = vsyncpa [#allocation4], 0
    %16 = vsyncpa [#allocation10], 0
    // Predicated region
    $region2: #{tpu_custom_call.1} parent=1 // pred_check
      _
    $region3: #{tpu_custom_call.1} parent=1 // pred_check_branch
      %18 = sbr.rel (0) target = $region5
    $region4: #{tpu_custom_call.1} parent=1 // pred_region
      %s20 = ssub.s32 32, 32
      %21 = vsyncadd [#allocation3], %s20
      %s23 = sshll.u32 [#allocation2], 4
      %s24 = int_to_ptr.vmem [resolvable:$true] %s23
      %26 = dma.hbm_to_vmem [thread:$0]  %s0, 32, %s24, [#allocation3]
    $region5: #{tpu_custom_call.1} parent=1 // pred_fallthru
      _
    // Predicated region
    $region6: #{tpu_custom_call.1} parent=1 // pred_check
      _
    $region7: #{tpu_custom_call.1} parent=1 // pred_check_branch
      %28 = sbr.rel (0) target = $region9
    $region8: #{tpu_custom_call.1} parent=1 // pred_region
      %s30 = ssub.s32 64, 64
      %31 = vsyncadd [#allocation6], %s30
      %s33 = sshll.u32 [#allocation5], 4
      %s34 = int_to_ptr.vmem [resolvable:$true] %s33
      %36 = dma.hbm_to_vmem [thread:$0]  %s1, 64, %s34, [#allocation6]
    $region9: #{tpu_custom_call.1} parent=1 // pred_fallthru
      _
    // Predicated region
    $region10: #{tpu_custom_call.1} parent=1 // pred_check
      _
    $region11: #{tpu_custom_call.1} parent=1 // pred_check_branch
      %38 = sbr.rel (0) target = $region13
    $region12: #{tpu_custom_call.1} parent=1 // pred_region
      %s40 = ssub.s32 64, 64
      %41 = vsyncadd [#allocation6], %s40
      %s43 = sshll.u32 [#allocation7], 4
      %s44 = int_to_ptr.vmem [resolvable:$true] %s43
      %46 = dma.hbm_to_vmem [thread:$0]  %s2, 64, %s44, [#allocation6]
    $region13: #{tpu_custom_call.1} parent=1 // pred_fallthru
      _
    // Predicated region
    $region14: #{tpu_custom_call.1} parent=1 // pred_check
      _
    $region15: #{tpu_custom_call.1} parent=1 // pred_check_branch
      %48 = sbr.rel (0) target = $region17
    $region16: #{tpu_custom_call.1} parent=1 // pred_region
      _
    $region17: #{tpu_custom_call.1} parent=1 // pred_fallthru
      _
    // Predicated region
    $region18: #{tpu_custom_call.1} parent=1 // pred_check
      _
    $region19: #{tpu_custom_call.1} parent=1 // pred_check_branch
      %50 = sbr.rel (0) target = $region21
    $region20: #{tpu_custom_call.1} parent=1 // pred_region
      _
    $region21: #{tpu_custom_call.1} parent=1 // pred_fallthru
      _
    // Predicated region
    $region22: #{tpu_custom_call.1} parent=1 // pred_check
      _
    $region23: #{tpu_custom_call.1} parent=1 // pred_check_branch
      %52 = sbr.rel (0) target = $region25
    $region24: #{tpu_custom_call.1} parent=1 // pred_region
      %53 = dma.done [#allocation3], 32
    $region25: #{tpu_custom_call.1} parent=1 // pred_fallthru
      _
    // Predicated region
    $region26: #{tpu_custom_call.1} parent=1 // pred_check
      _
    $region27: #{tpu_custom_call.1} parent=1 // pred_check_branch
      %55 = sbr.rel (0) target = $region29
    $region28: #{tpu_custom_call.1} parent=1 // pred_region
      %56 = dma.done [#allocation6], 64
    $region29: #{tpu_custom_call.1} parent=1 // pred_fallthru
      _
    // Predicated region
    $region30: #{tpu_custom_call.1} parent=1 // pred_check
      _
    $region31: #{tpu_custom_call.1} parent=1 // pred_check_branch
      %58 = sbr.rel (0) target = $region33
    $region32: #{tpu_custom_call.1} parent=1 // pred_region
      %59 = dma.done [#allocation6], 64
    $region33: #{tpu_custom_call.1} parent=1 // pred_fallthru
      _
    %v60 = vld [vmem:[#allocation2] sm:$0x3]
    %v61 = vld [vmem:[#allocation5] sm:$0xf]
    %v62 = vld [vmem:[#allocation7] sm:$0xf]
    %vm63 = vcmask 261120
    %v65 = vsel %vm63, %v60, 0
    %v68 = vsel %vm63, %v61, 0
    %70 = vmatprep.subr.mxu0 0.0
    %71 = vmatpush1.xpose.msra.mxu0 0.0
    %72 = vmatprep.subr.mxu0 0.0
    %73 = vmatpush1.xpose.msra.mxu0 0.0
    %74 = vmatprep.subr.mxu0 0.0
    %75 = vmatpush1.xpose.msra.mxu0 0.0
    %76 = vmatprep.subr.mxu0 0.0
    %77 = vmatpush1.xpose.msra.mxu0 0.0
    %78 = vmatprep.subr.mxu0 0.0
    %79 = vmatpush1.xpose.msra.mxu0 0.0
    %80 = vmatprep.subr.mxu0 0.0
    %81 = vmatpush1.xpose.msra.mxu0 0.0
    %82 = vmatprep.subr.mxu0 0.0
    %83 = vmatpush1.xpose.msra.mxu0 0.0
    %84 = vmatprep.subr.mxu0 0.0
    %85 = vmatpush1.xpose.msra.mxu0 0.0
    %86 = vmatprep.subr.mxu0 0.0
    %87 = vmatpush1.xpose.msra.mxu0 0.0
    %88 = vmatprep.subr.mxu0 0.0
    %89 = vmatpush1.xpose.msra.mxu0 0.0
    %90 = vmatprep.subr.mxu0 0.0
    %91 = vmatpush1.xpose.msra.mxu0 0.0
    %92 = vmatprep.subr.mxu0 0.0
    %93 = vmatpush1.xpose.msra.mxu0 0.0
    %94 = vmatprep.subr.mxu0 0.0
    %95 = vmatpush1.xpose.msra.mxu0 0.0
    %96 = vmatprep.subr.mxu0 0.0
    %97 = vmatpush1.xpose.msra.mxu0 0.0
    %98 = vmatprep.subr.mxu0 0.0
    %99 = vmatpush1.xpose.msra.mxu0 0.0
    %100 = vmatprep.subr.mxu0 0.0
    %v101 = vand.u32 %v68, 4294901760
    %102 = vmatpush1.xpose.msra.mxu0 %v101
    %103 = vmatprep.subr.mxu0 0.0
    %104 = vmatpush2.xpose.msra.mxu0 0.0
    %105 = vmatprep.subr.mxu0 0.0
    %106 = vmatpush2.xpose.msra.mxu0 0.0
    %107 = vmatprep.subr.mxu0 0.0
    %108 = vmatpush2.xpose.msra.mxu0 0.0
    %109 = vmatprep.subr.mxu0 0.0
    %110 = vmatpush2.xpose.msra.mxu0 0.0
    %111 = vmatprep.subr.mxu0 0.0
    %112 = vmatpush2.xpose.msra.mxu0 0.0
    %113 = vmatprep.subr.mxu0 0.0
    %114 = vmatpush2.xpose.msra.mxu0 0.0
    %115 = vmatprep.subr.mxu0 0.0
    %116 = vmatpush2.xpose.msra.mxu0 0.0
    %117 = vmatprep.subr.mxu0 0.0
    %118 = vmatpush2.xpose.msra.mxu0 0.0
    %119 = vmatprep.subr.mxu0 0.0
    %120 = vmatpush2.xpose.msra.mxu0 0.0
    %121 = vmatprep.subr.mxu0 0.0
    %122 = vmatpush2.xpose.msra.mxu0 0.0
    %123 = vmatprep.subr.mxu0 0.0
    %124 = vmatpush2.xpose.msra.mxu0 0.0
    %125 = vmatprep.subr.mxu0 0.0
    %126 = vmatpush2.xpose.msra.mxu0 0.0
    %127 = vmatprep.subr.mxu0 0.0
    %128 = vmatpush2.xpose.msra.mxu0 0.0
    %129 = vmatprep.subr.mxu0 0.0
    %130 = vmatpush2.xpose.msra.mxu0 0.0
    %131 = vmatprep.subr.mxu0 0.0
    %132 = vmatpush2.xpose.msra.mxu0 0.0
    %133 = vmatprep.subr.mxu0 0.0
    %134 = vmatpush2.xpose.msra.mxu0 0.0
    %135 = vmatprep.mubr.f32.mxu0 0.0
    %v136 = vand.u32 %v65, 4294901760
    %v137 = vsub.f32 %v65, %v136
    %v138 = vand.u32 %v137, 4294901760
    %v139 = vsub.f32 %v137, %v138
    %v140 = vand.u32 %v139, 4294901760
    %141 = vmatmul.mubr.f32.gmra.mxu0 %v140
    %v142 = vpop.f32.mrf.mxu0
    %v143 = vadd.f32 0.0, %v142
    %v144 = vpop.f32.mrf.mxu0
    %145 = vdwg.mxu0
    %146 = vmatprep.subr.mxu0 0.0
    %147 = vmatpush1.xpose.msra.mxu0 0.0
    %148 = vmatprep.subr.mxu0 0.0
    %149 = vmatpush1.xpose.msra.mxu0 0.0
    %150 = vmatprep.subr.mxu0 0.0
    %151 = vmatpush1.xpose.msra.mxu0 0.0
    %152 = vmatprep.subr.mxu0 0.0
    %153 = vmatpush1.xpose.msra.mxu0 0.0
    %154 = vmatprep.subr.mxu0 0.0
    %155 = vmatpush1.xpose.msra.mxu0 0.0
    %156 = vmatprep.subr.mxu0 0.0
    %157 = vmatpush1.xpose.msra.mxu0 0.0
    %158 = vmatprep.subr.mxu0 0.0
    %159 = vmatpush1.xpose.msra.mxu0 0.0
    %160 = vmatprep.subr.mxu0 0.0
    %161 = vmatpush1.xpose.msra.mxu0 0.0
    %162 = vmatprep.subr.mxu0 0.0
    %163 = vmatpush1.xpose.msra.mxu0 0.0
    %164 = vmatprep.subr.mxu0 0.0
    %165 = vmatpush1.xpose.msra.mxu0 0.0
    %166 = vmatprep.subr.mxu0 0.0
    %167 = vmatpush1.xpose.msra.mxu0 0.0
    %168 = vmatprep.subr.mxu0 0.0
    %169 = vmatpush1.xpose.msra.mxu0 0.0
    %170 = vmatprep.subr.mxu0 0.0
    %171 = vmatpush1.xpose.msra.mxu0 0.0
    %172 = vmatprep.subr.mxu0 0.0
    %173 = vmatpush1.xpose.msra.mxu0 0.0
    %174 = vmatprep.subr.mxu0 0.0
    %175 = vmatpush1.xpose.msra.mxu0 0.0
    %176 = vmatprep.subr.mxu0 0.0
    %v177 = vand.u32 %v68, 4294901760
    %v178 = vsub.f32 %v68, %v177
    %v179 = vand.u32 %v178, 4294901760
    %v180 = vsub.f32 %v178, %v179
    %v181 = vand.u32 %v180, 4294901760
    %182 = vmatpush1.xpose.msra.mxu0 %v181
    %183 = vmatprep.subr.mxu0 0.0
    %184 = vmatpush2.xpose.msra.mxu0 0.0
    %185 = vmatprep.subr.mxu0 0.0
    %186 = vmatpush2.xpose.msra.mxu0 0.0
    %187 = vmatprep.subr.mxu0 0.0
    %188 = vmatpush2.xpose.msra.mxu0 0.0
    %189 = vmatprep.subr.mxu0 0.0
    %190 = vmatpush2.xpose.msra.mxu0 0.0
    %191 = vmatprep.subr.mxu0 0.0
    %192 = vmatpush2.xpose.msra.mxu0 0.0
    %193 = vmatprep.subr.mxu0 0.0
    %194 = vmatpush2.xpose.msra.mxu0 0.0
    %195 = vmatprep.subr.mxu0 0.0
    %196 = vmatpush2.xpose.msra.mxu0 0.0
    %197 = vmatprep.subr.mxu0 0.0
    %198 = vmatpush2.xpose.msra.mxu0 0.0
    %199 = vmatprep.subr.mxu0 0.0
    %200 = vmatpush2.xpose.msra.mxu0 0.0
    %201 = vmatprep.subr.mxu0 0.0
    %202 = vmatpush2.xpose.msra.mxu0 0.0
    %203 = vmatprep.subr.mxu0 0.0
    %204 = vmatpush2.xpose.msra.mxu0 0.0
    %205 = vmatprep.subr.mxu0 0.0
    %206 = vmatpush2.xpose.msra.mxu0 0.0
    %207 = vmatprep.subr.mxu0 0.0
    %208 = vmatpush2.xpose.msra.mxu0 0.0
    %209 = vmatprep.subr.mxu0 0.0
    %210 = vmatpush2.xpose.msra.mxu0 0.0
    %211 = vmatprep.subr.mxu0 0.0
    %212 = vmatpush2.xpose.msra.mxu0 0.0
    %213 = vmatprep.subr.mxu0 0.0
    %214 = vmatpush2.xpose.msra.mxu0 0.0
    %215 = vmatprep.mubr.f32.mxu0 0.0
    %v216 = vand.u32 %v65, 4294901760
    %217 = vmatmul.mubr.f32.gmra.mxu0 %v216
    %v218 = vpop.f32.mrf.mxu0
    %v219 = vadd.f32 %v143, %v218
    %v220 = vpop.f32.mrf.mxu0
    %221 = vdwg.mxu0
    %222 = vmatprep.subr.mxu0 0.0
    %223 = vmatpush1.xpose.msra.mxu0 0.0
    %224 = vmatprep.subr.mxu0 0.0
    %225 = vmatpush1.xpose.msra.mxu0 0.0
    %226 = vmatprep.subr.mxu0 0.0
    %227 = vmatpush1.xpose.msra.mxu0 0.0
    %228 = vmatprep.subr.mxu0 0.0
    %229 = vmatpush1.xpose.msra.mxu0 0.0
    %230 = vmatprep.subr.mxu0 0.0
    %231 = vmatpush1.xpose.msra.mxu0 0.0
    %232 = vmatprep.subr.mxu0 0.0
    %233 = vmatpush1.xpose.msra.mxu0 0.0
    %234 = vmatprep.subr.mxu0 0.0
    %235 = vmatpush1.xpose.msra.mxu0 0.0
    %236 = vmatprep.subr.mxu0 0.0
    %237 = vmatpush1.xpose.msra.mxu0 0.0
    %238 = vmatprep.subr.mxu0 0.0
    %239 = vmatpush1.xpose.msra.mxu0 0.0
    %240 = vmatprep.subr.mxu0 0.0
    %241 = vmatpush1.xpose.msra.mxu0 0.0
    %242 = vmatprep.subr.mxu0 0.0
    %243 = vmatpush1.xpose.msra.mxu0 0.0
    %244 = vmatprep.subr.mxu0 0.0
    %245 = vmatpush1.xpose.msra.mxu0 0.0
    %246 = vmatprep.subr.mxu0 0.0
    %247 = vmatpush1.xpose.msra.mxu0 0.0
    %248 = vmatprep.subr.mxu0 0.0
    %249 = vmatpush1.xpose.msra.mxu0 0.0
    %250 = vmatprep.subr.mxu0 0.0
    %251 = vmatpush1.xpose.msra.mxu0 0.0
    %252 = vmatprep.subr.mxu0 0.0
    %v253 = vand.u32 %v68, 4294901760
    %v254 = vsub.f32 %v68, %v253
    %255 = vmatpush1.xpose.msra.mxu0 %v254
    %256 = vmatprep.subr.mxu0 0.0
    %257 = vmatpush2.xpose.msra.mxu0 0.0
    %258 = vmatprep.subr.mxu0 0.0
    %259 = vmatpush2.xpose.msra.mxu0 0.0
    %260 = vmatprep.subr.mxu0 0.0
    %261 = vmatpush2.xpose.msra.mxu0 0.0
    %262 = vmatprep.subr.mxu0 0.0
    %263 = vmatpush2.xpose.msra.mxu0 0.0
    %264 = vmatprep.subr.mxu0 0.0
    %265 = vmatpush2.xpose.msra.mxu0 0.0
    %266 = vmatprep.subr.mxu0 0.0
    %267 = vmatpush2.xpose.msra.mxu0 0.0
    %268 = vmatprep.subr.mxu0 0.0
    %269 = vmatpush2.xpose.msra.mxu0 0.0
    %270 = vmatprep.subr.mxu0 0.0
    %271 = vmatpush2.xpose.msra.mxu0 0.0
    %272 = vmatprep.subr.mxu0 0.0
    %273 = vmatpush2.xpose.msra.mxu0 0.0
    %274 = vmatprep.subr.mxu0 0.0
    %275 = vmatpush2.xpose.msra.mxu0 0.0
    %276 = vmatprep.subr.mxu0 0.0
    %277 = vmatpush2.xpose.msra.mxu0 0.0
    %278 = vmatprep.subr.mxu0 0.0
    %279 = vmatpush2.xpose.msra.mxu0 0.0
    %280 = vmatprep.subr.mxu0 0.0
    %281 = vmatpush2.xpose.msra.mxu0 0.0
    %282 = vmatprep.subr.mxu0 0.0
    %283 = vmatpush2.xpose.msra.mxu0 0.0
    %284 = vmatprep.subr.mxu0 0.0
    %285 = vmatpush2.xpose.msra.mxu0 0.0
    %286 = vmatprep.subr.mxu0 0.0
    %287 = vmatpush2.xpose.msra.mxu0 0.0
    %288 = vmatprep.mubr.f32.mxu0 0.0
    %v289 = vand.u32 %v65, 4294901760
    %v290 = vsub.f32 %v65, %v289
    %291 = vmatmul.mubr.f32.gmra.mxu0 %v290
    %v292 = vpop.f32.mrf.mxu0
    %v293 = vadd.f32 %v219, %v292
    %v294 = vpop.f32.mrf.mxu0
    %295 = vdwg.mxu0
    %296 = vmatprep.subr.mxu0 0.0
    %297 = vmatpush1.xpose.msra.mxu0 0.0
    %298 = vmatprep.subr.mxu0 0.0
    %299 = vmatpush1.xpose.msra.mxu0 0.0
    %300 = vmatprep.subr.mxu0 0.0
    %301 = vmatpush1.xpose.msra.mxu0 0.0
    %302 = vmatprep.subr.mxu0 0.0
    %303 = vmatpush1.xpose.msra.mxu0 0.0
    %304 = vmatprep.subr.mxu0 0.0
    %305 = vmatpush1.xpose.msra.mxu0 0.0
    %306 = vmatprep.subr.mxu0 0.0
    %307 = vmatpush1.xpose.msra.mxu0 0.0
    %308 = vmatprep.subr.mxu0 0.0
    %309 = vmatpush1.xpose.msra.mxu0 0.0
    %310 = vmatprep.subr.mxu0 0.0
    %311 = vmatpush1.xpose.msra.mxu0 0.0
    %312 = vmatprep.subr.mxu0 0.0
    %313 = vmatpush1.xpose.msra.mxu0 0.0
    %314 = vmatprep.subr.mxu0 0.0
    %315 = vmatpush1.xpose.msra.mxu0 0.0
    %316 = vmatprep.subr.mxu0 0.0
    %317 = vmatpush1.xpose.msra.mxu0 0.0
    %318 = vmatprep.subr.mxu0 0.0
    %319 = vmatpush1.xpose.msra.mxu0 0.0
    %320 = vmatprep.subr.mxu0 0.0
    %321 = vmatpush1.xpose.msra.mxu0 0.0
    %322 = vmatprep.subr.mxu0 0.0
    %323 = vmatpush1.xpose.msra.mxu0 0.0
    %324 = vmatprep.subr.mxu0 0.0
    %325 = vmatpush1.xpose.msra.mxu0 0.0
    %326 = vmatprep.subr.mxu0 0.0
    %v327 = vand.u32 %v68, 4294901760
    %328 = vmatpush1.xpose.msra.mxu0 %v327
    %329 = vmatprep.subr.mxu0 0.0
    %330 = vmatpush2.xpose.msra.mxu0 0.0
    %331 = vmatprep.subr.mxu0 0.0
    %332 = vmatpush2.xpose.msra.mxu0 0.0
    %333 = vmatprep.subr.mxu0 0.0
    %334 = vmatpush2.xpose.msra.mxu0 0.0
    %335 = vmatprep.subr.mxu0 0.0
    %336 = vmatpush2.xpose.msra.mxu0 0.0
    %337 = vmatprep.subr.mxu0 0.0
    %338 = vmatpush2.xpose.msra.mxu0 0.0
    %339 = vmatprep.subr.mxu0 0.0
    %340 = vmatpush2.xpose.msra.mxu0 0.0
    %341 = vmatprep.subr.mxu0 0.0
    %342 = vmatpush2.xpose.msra.mxu0 0.0
    %343 = vmatprep.subr.mxu0 0.0
    %344 = vmatpush2.xpose.msra.mxu0 0.0
    %345 = vmatprep.subr.mxu0 0.0
    %346 = vmatpush2.xpose.msra.mxu0 0.0
    %347 = vmatprep.subr.mxu0 0.0
    %348 = vmatpush2.xpose.msra.mxu0 0.0
    %349 = vmatprep.subr.mxu0 0.0
    %350 = vmatpush2.xpose.msra.mxu0 0.0
    %351 = vmatprep.subr.mxu0 0.0
    %352 = vmatpush2.xpose.msra.mxu0 0.0
    %353 = vmatprep.subr.mxu0 0.0
    %354 = vmatpush2.xpose.msra.mxu0 0.0
    %355 = vmatprep.subr.mxu0 0.0
    %356 = vmatpush2.xpose.msra.mxu0 0.0
    %357 = vmatprep.subr.mxu0 0.0
    %358 = vmatpush2.xpose.msra.mxu0 0.0
    %359 = vmatprep.subr.mxu0 0.0
    %360 = vmatpush2.xpose.msra.mxu0 0.0
    %361 = vmatprep.mubr.f32.mxu0 0.0
    %v362 = vand.u32 %v65, 4294901760
    %v363 = vsub.f32 %v65, %v362
    %v364 = vand.u32 %v363, 4294901760
    %365 = vmatmul.mubr.f32.gmra.mxu0 %v364
    %v366 = vpop.f32.mrf.mxu0
    %v367 = vadd.f32 %v293, %v366
    %v368 = vpop.f32.mrf.mxu0
    %369 = vdwg.mxu0
    %370 = vmatprep.subr.mxu0 0.0
    %371 = vmatpush1.xpose.msra.mxu0 0.0
    %372 = vmatprep.subr.mxu0 0.0
    %373 = vmatpush1.xpose.msra.mxu0 0.0
    %374 = vmatprep.subr.mxu0 0.0
    %375 = vmatpush1.xpose.msra.mxu0 0.0
    %376 = vmatprep.subr.mxu0 0.0
    %377 = vmatpush1.xpose.msra.mxu0 0.0
    %378 = vmatprep.subr.mxu0 0.0
    %379 = vmatpush1.xpose.msra.mxu0 0.0
    %380 = vmatprep.subr.mxu0 0.0
    %381 = vmatpush1.xpose.msra.mxu0 0.0
    %382 = vmatprep.subr.mxu0 0.0
    %383 = vmatpush1.xpose.msra.mxu0 0.0
    %384 = vmatprep.subr.mxu0 0.0
    %385 = vmatpush1.xpose.msra.mxu0 0.0
    %386 = vmatprep.subr.mxu0 0.0
    %387 = vmatpush1.xpose.msra.mxu0 0.0
    %388 = vmatprep.subr.mxu0 0.0
    %389 = vmatpush1.xpose.msra.mxu0 0.0
    %390 = vmatprep.subr.mxu0 0.0
    %391 = vmatpush1.xpose.msra.mxu0 0.0
    %392 = vmatprep.subr.mxu0 0.0
    %393 = vmatpush1.xpose.msra.mxu0 0.0
    %394 = vmatprep.subr.mxu0 0.0
    %395 = vmatpush1.xpose.msra.mxu0 0.0
    %396 = vmatprep.subr.mxu0 0.0
    %397 = vmatpush1.xpose.msra.mxu0 0.0
    %398 = vmatprep.subr.mxu0 0.0
    %399 = vmatpush1.xpose.msra.mxu0 0.0
    %400 = vmatprep.subr.mxu0 0.0
    %v401 = vand.u32 %v68, 4294901760
    %v402 = vsub.f32 %v68, %v401
    %v403 = vand.u32 %v402, 4294901760
    %404 = vmatpush1.xpose.msra.mxu0 %v403
    %405 = vmatprep.subr.mxu0 0.0
    %406 = vmatpush2.xpose.msra.mxu0 0.0
    %407 = vmatprep.subr.mxu0 0.0
    %408 = vmatpush2.xpose.msra.mxu0 0.0
    %409 = vmatprep.subr.mxu0 0.0
    %410 = vmatpush2.xpose.msra.mxu0 0.0
    %411 = vmatprep.subr.mxu0 0.0
    %412 = vmatpush2.xpose.msra.mxu0 0.0
    %413 = vmatprep.subr.mxu0 0.0
    %414 = vmatpush2.xpose.msra.mxu0 0.0
    %415 = vmatprep.subr.mxu0 0.0
    %416 = vmatpush2.xpose.msra.mxu0 0.0
    %417 = vmatprep.subr.mxu0 0.0
    %418 = vmatpush2.xpose.msra.mxu0 0.0
    %419 = vmatprep.subr.mxu0 0.0
    %420 = vmatpush2.xpose.msra.mxu0 0.0
    %421 = vmatprep.subr.mxu0 0.0
    %422 = vmatpush2.xpose.msra.mxu0 0.0
    %423 = vmatprep.subr.mxu0 0.0
    %424 = vmatpush2.xpose.msra.mxu0 0.0
    %425 = vmatprep.subr.mxu0 0.0
    %426 = vmatpush2.xpose.msra.mxu0 0.0
    %427 = vmatprep.subr.mxu0 0.0
    %428 = vmatpush2.xpose.msra.mxu0 0.0
    %429 = vmatprep.subr.mxu0 0.0
    %430 = vmatpush2.xpose.msra.mxu0 0.0
    %431 = vmatprep.subr.mxu0 0.0
    %432 = vmatpush2.xpose.msra.mxu0 0.0
    %433 = vmatprep.subr.mxu0 0.0
    %434 = vmatpush2.xpose.msra.mxu0 0.0
    %435 = vmatprep.subr.mxu0 0.0
    %436 = vmatpush2.xpose.msra.mxu0 0.0
    %437 = vmatprep.mubr.f32.mxu0 0.0
    %v438 = vand.u32 %v65, 4294901760
    %439 = vmatmul.mubr.f32.gmra.mxu0 %v438
    %v440 = vpop.f32.mrf.mxu0
    %v441 = vadd.f32 %v367, %v440
    %v442 = vpop.f32.mrf.mxu0
    %443 = vdwg.mxu0
    %444 = vmatprep.subr.mxu0 0.0
    %445 = vmatpush1.xpose.msra.mxu0 0.0
    %446 = vmatprep.subr.mxu0 0.0
    %447 = vmatpush1.xpose.msra.mxu0 0.0
    %448 = vmatprep.subr.mxu0 0.0
    %449 = vmatpush1.xpose.msra.mxu0 0.0
    %450 = vmatprep.subr.mxu0 0.0
    %451 = vmatpush1.xpose.msra.mxu0 0.0
    %452 = vmatprep.subr.mxu0 0.0
    %453 = vmatpush1.xpose.msra.mxu0 0.0
    %454 = vmatprep.subr.mxu0 0.0
    %455 = vmatpush1.xpose.msra.mxu0 0.0
    %456 = vmatprep.subr.mxu0 0.0
    %457 = vmatpush1.xpose.msra.mxu0 0.0
    %458 = vmatprep.subr.mxu0 0.0
    %459 = vmatpush1.xpose.msra.mxu0 0.0
    %460 = vmatprep.subr.mxu0 0.0
    %461 = vmatpush1.xpose.msra.mxu0 0.0
    %462 = vmatprep.subr.mxu0 0.0
    %463 = vmatpush1.xpose.msra.mxu0 0.0
    %464 = vmatprep.subr.mxu0 0.0
    %465 = vmatpush1.xpose.msra.mxu0 0.0
    %466 = vmatprep.subr.mxu0 0.0
    %467 = vmatpush1.xpose.msra.mxu0 0.0
    %468 = vmatprep.subr.mxu0 0.0
    %469 = vmatpush1.xpose.msra.mxu0 0.0
    %470 = vmatprep.subr.mxu0 0.0
    %471 = vmatpush1.xpose.msra.mxu0 0.0
    %472 = vmatprep.subr.mxu0 0.0
    %473 = vmatpush1.xpose.msra.mxu0 0.0
    %474 = vmatprep.subr.mxu0 0.0
    %v475 = vand.u32 %v68, 4294901760
    %476 = vmatpush1.xpose.msra.mxu0 %v475
    %477 = vmatprep.subr.mxu0 0.0
    %478 = vmatpush2.xpose.msra.mxu0 0.0
    %479 = vmatprep.subr.mxu0 0.0
    %480 = vmatpush2.xpose.msra.mxu0 0.0
    %481 = vmatprep.subr.mxu0 0.0
    %482 = vmatpush2.xpose.msra.mxu0 0.0
    %483 = vmatprep.subr.mxu0 0.0
    %484 = vmatpush2.xpose.msra.mxu0 0.0
    %485 = vmatprep.subr.mxu0 0.0
    %486 = vmatpush2.xpose.msra.mxu0 0.0
    %487 = vmatprep.subr.mxu0 0.0
    %488 = vmatpush2.xpose.msra.mxu0 0.0
    %489 = vmatprep.subr.mxu0 0.0
    %490 = vmatpush2.xpose.msra.mxu0 0.0
    %491 = vmatprep.subr.mxu0 0.0
    %492 = vmatpush2.xpose.msra.mxu0 0.0
    %493 = vmatprep.subr.mxu0 0.0
    %494 = vmatpush2.xpose.msra.mxu0 0.0
    %495 = vmatprep.subr.mxu0 0.0
    %496 = vmatpush2.xpose.msra.mxu0 0.0
    %497 = vmatprep.subr.mxu0 0.0
    %498 = vmatpush2.xpose.msra.mxu0 0.0
    %499 = vmatprep.subr.mxu0 0.0
    %500 = vmatpush2.xpose.msra.mxu0 0.0
    %501 = vmatprep.subr.mxu0 0.0
    %502 = vmatpush2.xpose.msra.mxu0 0.0
    %503 = vmatprep.subr.mxu0 0.0
    %504 = vmatpush2.xpose.msra.mxu0 0.0
    %505 = vmatprep.subr.mxu0 0.0
    %506 = vmatpush2.xpose.msra.mxu0 0.0
    %507 = vmatprep.subr.mxu0 0.0
    %508 = vmatpush2.xpose.msra.mxu0 0.0
    %509 = vmatprep.mubr.f32.mxu0 0.0
    %v510 = vand.u32 %v65, 4294901760
    %511 = vmatmul.mubr.f32.gmra.mxu0 %v510
    %v512 = vpop.f32.mrf.mxu0
    %v513 = vadd.f32 %v441, %v512
    %v514 = vpop.f32.mrf.mxu0
    %515 = vdwg.mxu0
    %v516 = vmul.f32 %v513, 0.125
    %vm517 = vcmask 31744
    %v519 = vsel %vm517, %v516, 0
    %vm521 = vcmask 1043456
    %v523 = vsel %vm521, %v62, 0
    %525 = vmatprep.subr.mxu0 0.0
    %526 = vmatpush1.msra.mxu0 0.0
    %527 = vmatprep.subr.mxu0 0.0
    %528 = vmatpush1.msra.mxu0 0.0
    %529 = vmatprep.subr.mxu0 0.0
    %530 = vmatpush1.msra.mxu0 0.0
    %531 = vmatprep.subr.mxu0 0.0
    %532 = vmatpush1.msra.mxu0 0.0
    %533 = vmatprep.subr.mxu0 0.0
    %534 = vmatpush1.msra.mxu0 0.0
    %535 = vmatprep.subr.mxu0 0.0
    %536 = vmatpush1.msra.mxu0 0.0
    %537 = vmatprep.subr.mxu0 0.0
    %538 = vmatpush1.msra.mxu0 0.0
    %539 = vmatprep.subr.mxu0 0.0
    %540 = vmatpush1.msra.mxu0 0.0
    %541 = vmatprep.subr.mxu0 0.0
    %542 = vmatpush1.msra.mxu0 0.0
    %543 = vmatprep.subr.mxu0 0.0
    %544 = vmatpush1.msra.mxu0 0.0
    %545 = vmatprep.subr.mxu0 0.0
    %546 = vmatpush1.msra.mxu0 0.0
    %547 = vmatprep.subr.mxu0 0.0
    %548 = vmatpush1.msra.mxu0 0.0
    %549 = vmatprep.subr.mxu0 0.0
    %550 = vmatpush1.msra.mxu0 0.0
    %551 = vmatprep.subr.mxu0 0.0
    %552 = vmatpush1.msra.mxu0 0.0
    %553 = vmatprep.subr.mxu0 0.0
    %554 = vmatpush1.msra.mxu0 0.0
    %555 = vmatprep.subr.mxu0 0.0
    %v556 = vand.u32 %v523, 4294901760
    %557 = vmatpush1.msra.mxu0 %v556
    %558 = vmatprep.subr.mxu0 0.0
    %559 = vmatpush2.msra.mxu0 0.0
    %560 = vmatprep.subr.mxu0 0.0
    %561 = vmatpush2.msra.mxu0 0.0
    %562 = vmatprep.subr.mxu0 0.0
    %563 = vmatpush2.msra.mxu0 0.0
    %564 = vmatprep.subr.mxu0 0.0
    %565 = vmatpush2.msra.mxu0 0.0
    %566 = vmatprep.subr.mxu0 0.0
    %567 = vmatpush2.msra.mxu0 0.0
    %568 = vmatprep.subr.mxu0 0.0
    %569 = vmatpush2.msra.mxu0 0.0
    %570 = vmatprep.subr.mxu0 0.0
    %571 = vmatpush2.msra.mxu0 0.0
    %572 = vmatprep.subr.mxu0 0.0
    %573 = vmatpush2.msra.mxu0 0.0
    %574 = vmatprep.subr.mxu0 0.0
    %575 = vmatpush2.msra.mxu0 0.0
    %576 = vmatprep.subr.mxu0 0.0
    %577 = vmatpush2.msra.mxu0 0.0
    %578 = vmatprep.subr.mxu0 0.0
    %579 = vmatpush2.msra.mxu0 0.0
    %580 = vmatprep.subr.mxu0 0.0
    %581 = vmatpush2.msra.mxu0 0.0
    %582 = vmatprep.subr.mxu0 0.0
    %583 = vmatpush2.msra.mxu0 0.0
    %584 = vmatprep.subr.mxu0 0.0
    %585 = vmatpush2.msra.mxu0 0.0
    %586 = vmatprep.subr.mxu0 0.0
    %587 = vmatpush2.msra.mxu0 0.0
    %588 = vmatprep.subr.mxu0 0.0
    %589 = vmatpush2.msra.mxu0 0.0
    %590 = vmatprep.mubr.f32.mxu0 0.0
    %v591 = vand.u32 %v519, 4294901760
    %v592 = vsub.f32 %v519, %v591
    %v593 = vand.u32 %v592, 4294901760
    %v594 = vsub.f32 %v592, %v593
    %v595 = vand.u32 %v594, 4294901760
    %596 = vmatmul.mubr.f32.gmra.mxu0 %v595
    %v597 = vpop.f32.mrf.mxu0
    %v598 = vadd.f32 0.0, %v597
    %v599 = vpop.f32.mrf.mxu0
    %600 = vdwg.mxu0
    %601 = vmatprep.subr.mxu0 0.0
    %602 = vmatpush1.msra.mxu0 0.0
    %603 = vmatprep.subr.mxu0 0.0
    %604 = vmatpush1.msra.mxu0 0.0
    %605 = vmatprep.subr.mxu0 0.0
    %606 = vmatpush1.msra.mxu0 0.0
    %607 = vmatprep.subr.mxu0 0.0
    %608 = vmatpush1.msra.mxu0 0.0
    %609 = vmatprep.subr.mxu0 0.0
    %610 = vmatpush1.msra.mxu0 0.0
    %611 = vmatprep.subr.mxu0 0.0
    %612 = vmatpush1.msra.mxu0 0.0
    %613 = vmatprep.subr.mxu0 0.0
    %614 = vmatpush1.msra.mxu0 0.0
    %615 = vmatprep.subr.mxu0 0.0
    %616 = vmatpush1.msra.mxu0 0.0
    %617 = vmatprep.subr.mxu0 0.0
    %618 = vmatpush1.msra.mxu0 0.0
    %619 = vmatprep.subr.mxu0 0.0
    %620 = vmatpush1.msra.mxu0 0.0
    %621 = vmatprep.subr.mxu0 0.0
    %622 = vmatpush1.msra.mxu0 0.0
    %623 = vmatprep.subr.mxu0 0.0
    %624 = vmatpush1.msra.mxu0 0.0
    %625 = vmatprep.subr.mxu0 0.0
    %626 = vmatpush1.msra.mxu0 0.0
    %627 = vmatprep.subr.mxu0 0.0
    %628 = vmatpush1.msra.mxu0 0.0
    %629 = vmatprep.subr.mxu0 0.0
    %630 = vmatpush1.msra.mxu0 0.0
    %631 = vmatprep.subr.mxu0 0.0
    %v632 = vand.u32 %v523, 4294901760
    %v633 = vsub.f32 %v523, %v632
    %v634 = vand.u32 %v633, 4294901760
    %v635 = vsub.f32 %v633, %v634
    %v636 = vand.u32 %v635, 4294901760
    %637 = vmatpush1.msra.mxu0 %v636
    %638 = vmatprep.subr.mxu0 0.0
    %639 = vmatpush2.msra.mxu0 0.0
    %640 = vmatprep.subr.mxu0 0.0
    %641 = vmatpush2.msra.mxu0 0.0
    %642 = vmatprep.subr.mxu0 0.0
    %643 = vmatpush2.msra.mxu0 0.0
    %644 = vmatprep.subr.mxu0 0.0
    %645 = vmatpush2.msra.mxu0 0.0
    %646 = vmatprep.subr.mxu0 0.0
    %647 = vmatpush2.msra.mxu0 0.0
    %648 = vmatprep.subr.mxu0 0.0
    %649 = vmatpush2.msra.mxu0 0.0
    %650 = vmatprep.subr.mxu0 0.0
    %651 = vmatpush2.msra.mxu0 0.0
    %652 = vmatprep.subr.mxu0 0.0
    %653 = vmatpush2.msra.mxu0 0.0
    %654 = vmatprep.subr.mxu0 0.0
    %655 = vmatpush2.msra.mxu0 0.0
    %656 = vmatprep.subr.mxu0 0.0
    %657 = vmatpush2.msra.mxu0 0.0
    %658 = vmatprep.subr.mxu0 0.0
    %659 = vmatpush2.msra.mxu0 0.0
    %660 = vmatprep.subr.mxu0 0.0
    %661 = vmatpush2.msra.mxu0 0.0
    %662 = vmatprep.subr.mxu0 0.0
    %663 = vmatpush2.msra.mxu0 0.0
    %664 = vmatprep.subr.mxu0 0.0
    %665 = vmatpush2.msra.mxu0 0.0
    %666 = vmatprep.subr.mxu0 0.0
    %667 = vmatpush2.msra.mxu0 0.0
    %668 = vmatprep.subr.mxu0 0.0
    %669 = vmatpush2.msra.mxu0 0.0
    %670 = vmatprep.mubr.f32.mxu0 0.0
    %v671 = vand.u32 %v519, 4294901760
    %672 = vmatmul.mubr.f32.gmra.mxu0 %v671
    %v673 = vpop.f32.mrf.mxu0
    %v674 = vadd.f32 %v598, %v673
    %v675 = vpop.f32.mrf.mxu0
    %676 = vdwg.mxu0
    %677 = vmatprep.subr.mxu0 0.0
    %678 = vmatpush1.msra.mxu0 0.0
    %679 = vmatprep.subr.mxu0 0.0
    %680 = vmatpush1.msra.mxu0 0.0
    %681 = vmatprep.subr.mxu0 0.0
    %682 = vmatpush1.msra.mxu0 0.0
    %683 = vmatprep.subr.mxu0 0.0
    %684 = vmatpush1.msra.mxu0 0.0
    %685 = vmatprep.subr.mxu0 0.0
    %686 = vmatpush1.msra.mxu0 0.0
    %687 = vmatprep.subr.mxu0 0.0
    %688 = vmatpush1.msra.mxu0 0.0
    %689 = vmatprep.subr.mxu0 0.0
    %690 = vmatpush1.msra.mxu0 0.0
    %691 = vmatprep.subr.mxu0 0.0
    %692 = vmatpush1.msra.mxu0 0.0
    %693 = vmatprep.subr.mxu0 0.0
    %694 = vmatpush1.msra.mxu0 0.0
    %695 = vmatprep.subr.mxu0 0.0
    %696 = vmatpush1.msra.mxu0 0.0
    %697 = vmatprep.subr.mxu0 0.0
    %698 = vmatpush1.msra.mxu0 0.0
    %699 = vmatprep.subr.mxu0 0.0
    %700 = vmatpush1.msra.mxu0 0.0
    %701 = vmatprep.subr.mxu0 0.0
    %702 = vmatpush1.msra.mxu0 0.0
    %703 = vmatprep.subr.mxu0 0.0
    %704 = vmatpush1.msra.mxu0 0.0
    %705 = vmatprep.subr.mxu0 0.0
    %706 = vmatpush1.msra.mxu0 0.0
    %707 = vmatprep.subr.mxu0 0.0
    %v708 = vand.u32 %v523, 4294901760
    %v709 = vsub.f32 %v523, %v708
    %710 = vmatpush1.msra.mxu0 %v709
    %711 = vmatprep.subr.mxu0 0.0
    %712 = vmatpush2.msra.mxu0 0.0
    %713 = vmatprep.subr.mxu0 0.0
    %714 = vmatpush2.msra.mxu0 0.0
    %715 = vmatprep.subr.mxu0 0.0
    %716 = vmatpush2.msra.mxu0 0.0
    %717 = vmatprep.subr.mxu0 0.0
    %718 = vmatpush2.msra.mxu0 0.0
    %719 = vmatprep.subr.mxu0 0.0
    %720 = vmatpush2.msra.mxu0 0.0
    %721 = vmatprep.subr.mxu0 0.0
    %722 = vmatpush2.msra.mxu0 0.0
    %723 = vmatprep.subr.mxu0 0.0
    %724 = vmatpush2.msra.mxu0 0.0
    %725 = vmatprep.subr.mxu0 0.0
    %726 = vmatpush2.msra.mxu0 0.0
    %727 = vmatprep.subr.mxu0 0.0
    %728 = vmatpush2.msra.mxu0 0.0
    %729 = vmatprep.subr.mxu0 0.0
    %730 = vmatpush2.msra.mxu0 0.0
    %731 = vmatprep.subr.mxu0 0.0
    %732 = vmatpush2.msra.mxu0 0.0
    %733 = vmatprep.subr.mxu0 0.0
    %734 = vmatpush2.msra.mxu0 0.0
    %735 = vmatprep.subr.mxu0 0.0
    %736 = vmatpush2.msra.mxu0 0.0
    %737 = vmatprep.subr.mxu0 0.0
    %738 = vmatpush2.msra.mxu0 0.0
    %739 = vmatprep.subr.mxu0 0.0
    %740 = vmatpush2.msra.mxu0 0.0
    %741 = vmatprep.subr.mxu0 0.0
    %742 = vmatpush2.msra.mxu0 0.0
    %743 = vmatprep.mubr.f32.mxu0 0.0
    %v744 = vand.u32 %v519, 4294901760
    %v745 = vsub.f32 %v519, %v744
    %746 = vmatmul.mubr.f32.gmra.mxu0 %v745
    %v747 = vpop.f32.mrf.mxu0
    %v748 = vadd.f32 %v674, %v747
    %v749 = vpop.f32.mrf.mxu0
    %750 = vdwg.mxu0
    %751 = vmatprep.subr.mxu0 0.0
    %752 = vmatpush1.msra.mxu0 0.0
    %753 = vmatprep.subr.mxu0 0.0
    %754 = vmatpush1.msra.mxu0 0.0
    %755 = vmatprep.subr.mxu0 0.0
    %756 = vmatpush1.msra.mxu0 0.0
    %757 = vmatprep.subr.mxu0 0.0
    %758 = vmatpush1.msra.mxu0 0.0
    %759 = vmatprep.subr.mxu0 0.0
    %760 = vmatpush1.msra.mxu0 0.0
    %761 = vmatprep.subr.mxu0 0.0
    %762 = vmatpush1.msra.mxu0 0.0
    %763 = vmatprep.subr.mxu0 0.0
    %764 = vmatpush1.msra.mxu0 0.0
    %765 = vmatprep.subr.mxu0 0.0
    %766 = vmatpush1.msra.mxu0 0.0
    %767 = vmatprep.subr.mxu0 0.0
    %768 = vmatpush1.msra.mxu0 0.0
    %769 = vmatprep.subr.mxu0 0.0
    %770 = vmatpush1.msra.mxu0 0.0
    %771 = vmatprep.subr.mxu0 0.0
    %772 = vmatpush1.msra.mxu0 0.0
    %773 = vmatprep.subr.mxu0 0.0
    %774 = vmatpush1.msra.mxu0 0.0
    %775 = vmatprep.subr.mxu0 0.0
    %776 = vmatpush1.msra.mxu0 0.0
    %777 = vmatprep.subr.mxu0 0.0
    %778 = vmatpush1.msra.mxu0 0.0
    %779 = vmatprep.subr.mxu0 0.0
    %780 = vmatpush1.msra.mxu0 0.0
    %781 = vmatprep.subr.mxu0 0.0
    %v782 = vand.u32 %v523, 4294901760
    %783 = vmatpush1.msra.mxu0 %v782
    %784 = vmatprep.subr.mxu0 0.0
    %785 = vmatpush2.msra.mxu0 0.0
    %786 = vmatprep.subr.mxu0 0.0
    %787 = vmatpush2.msra.mxu0 0.0
    %788 = vmatprep.subr.mxu0 0.0
    %789 = vmatpush2.msra.mxu0 0.0
    %790 = vmatprep.subr.mxu0 0.0
    %791 = vmatpush2.msra.mxu0 0.0
    %792 = vmatprep.subr.mxu0 0.0
    %793 = vmatpush2.msra.mxu0 0.0
    %794 = vmatprep.subr.mxu0 0.0
    %795 = vmatpush2.msra.mxu0 0.0
    %796 = vmatprep.subr.mxu0 0.0
    %797 = vmatpush2.msra.mxu0 0.0
    %798 = vmatprep.subr.mxu0 0.0
    %799 = vmatpush2.msra.mxu0 0.0
    %800 = vmatprep.subr.mxu0 0.0
    %801 = vmatpush2.msra.mxu0 0.0
    %802 = vmatprep.subr.mxu0 0.0
    %803 = vmatpush2.msra.mxu0 0.0
    %804 = vmatprep.subr.mxu0 0.0
    %805 = vmatpush2.msra.mxu0 0.0
    %806 = vmatprep.subr.mxu0 0.0
    %807 = vmatpush2.msra.mxu0 0.0
    %808 = vmatprep.subr.mxu0 0.0
    %809 = vmatpush2.msra.mxu0 0.0
    %810 = vmatprep.subr.mxu0 0.0
    %811 = vmatpush2.msra.mxu0 0.0
    %812 = vmatprep.subr.mxu0 0.0
    %813 = vmatpush2.msra.mxu0 0.0
    %814 = vmatprep.subr.mxu0 0.0
    %815 = vmatpush2.msra.mxu0 0.0
    %816 = vmatprep.mubr.f32.mxu0 0.0
    %v817 = vand.u32 %v519, 4294901760
    %v818 = vsub.f32 %v519, %v817
    %v819 = vand.u32 %v818, 4294901760
    %820 = vmatmul.mubr.f32.gmra.mxu0 %v819
    %v821 = vpop.f32.mrf.mxu0
    %v822 = vadd.f32 %v748, %v821
    %v823 = vpop.f32.mrf.mxu0
    %824 = vdwg.mxu0
    %825 = vmatprep.subr.mxu0 0.0
    %826 = vmatpush1.msra.mxu0 0.0
    %827 = vmatprep.subr.mxu0 0.0
    %828 = vmatpush1.msra.mxu0 0.0
    %829 = vmatprep.subr.mxu0 0.0
    %830 = vmatpush1.msra.mxu0 0.0
    %831 = vmatprep.subr.mxu0 0.0
    %832 = vmatpush1.msra.mxu0 0.0
    %833 = vmatprep.subr.mxu0 0.0
    %834 = vmatpush1.msra.mxu0 0.0
    %835 = vmatprep.subr.mxu0 0.0
    %836 = vmatpush1.msra.mxu0 0.0
    %837 = vmatprep.subr.mxu0 0.0
    %838 = vmatpush1.msra.mxu0 0.0
    %839 = vmatprep.subr.mxu0 0.0
    %840 = vmatpush1.msra.mxu0 0.0
    %841 = vmatprep.subr.mxu0 0.0
    %842 = vmatpush1.msra.mxu0 0.0
    %843 = vmatprep.subr.mxu0 0.0
    %844 = vmatpush1.msra.mxu0 0.0
    %845 = vmatprep.subr.mxu0 0.0
    %846 = vmatpush1.msra.mxu0 0.0
    %847 = vmatprep.subr.mxu0 0.0
    %848 = vmatpush1.msra.mxu0 0.0
    %849 = vmatprep.subr.mxu0 0.0
    %850 = vmatpush1.msra.mxu0 0.0
    %851 = vmatprep.subr.mxu0 0.0
    %852 = vmatpush1.msra.mxu0 0.0
    %853 = vmatprep.subr.mxu0 0.0
    %854 = vmatpush1.msra.mxu0 0.0
    %855 = vmatprep.subr.mxu0 0.0
    %v856 = vand.u32 %v523, 4294901760
    %v857 = vsub.f32 %v523, %v856
    %v858 = vand.u32 %v857, 4294901760
    %859 = vmatpush1.msra.mxu0 %v858
    %860 = vmatprep.subr.mxu0 0.0
    %861 = vmatpush2.msra.mxu0 0.0
    %862 = vmatprep.subr.mxu0 0.0
    %863 = vmatpush2.msra.mxu0 0.0
    %864 = vmatprep.subr.mxu0 0.0
    %865 = vmatpush2.msra.mxu0 0.0
    %866 = vmatprep.subr.mxu0 0.0
    %867 = vmatpush2.msra.mxu0 0.0
    %868 = vmatprep.subr.mxu0 0.0
    %869 = vmatpush2.msra.mxu0 0.0
    %870 = vmatprep.subr.mxu0 0.0
    %871 = vmatpush2.msra.mxu0 0.0
    %872 = vmatprep.subr.mxu0 0.0
    %873 = vmatpush2.msra.mxu0 0.0
    %874 = vmatprep.subr.mxu0 0.0
    %875 = vmatpush2.msra.mxu0 0.0
    %876 = vmatprep.subr.mxu0 0.0
    %877 = vmatpush2.msra.mxu0 0.0
    %878 = vmatprep.subr.mxu0 0.0
    %879 = vmatpush2.msra.mxu0 0.0
    %880 = vmatprep.subr.mxu0 0.0
    %881 = vmatpush2.msra.mxu0 0.0
    %882 = vmatprep.subr.mxu0 0.0
    %883 = vmatpush2.msra.mxu0 0.0
    %884 = vmatprep.subr.mxu0 0.0
    %885 = vmatpush2.msra.mxu0 0.0
    %886 = vmatprep.subr.mxu0 0.0
    %887 = vmatpush2.msra.mxu0 0.0
    %888 = vmatprep.subr.mxu0 0.0
    %889 = vmatpush2.msra.mxu0 0.0
    %890 = vmatprep.subr.mxu0 0.0
    %891 = vmatpush2.msra.mxu0 0.0
    %892 = vmatprep.mubr.f32.mxu0 0.0
    %v893 = vand.u32 %v519, 4294901760
    %894 = vmatmul.mubr.f32.gmra.mxu0 %v893
    %v895 = vpop.f32.mrf.mxu0
    %v896 = vadd.f32 %v822, %v895
    %v897 = vpop.f32.mrf.mxu0
    %898 = vdwg.mxu0
    %899 = vmatprep.subr.mxu0 0.0
    %900 = vmatpush1.msra.mxu0 0.0
    %901 = vmatprep.subr.mxu0 0.0
    %902 = vmatpush1.msra.mxu0 0.0
    %903 = vmatprep.subr.mxu0 0.0
    %904 = vmatpush1.msra.mxu0 0.0
    %905 = vmatprep.subr.mxu0 0.0
    %906 = vmatpush1.msra.mxu0 0.0
    %907 = vmatprep.subr.mxu0 0.0
    %908 = vmatpush1.msra.mxu0 0.0
    %909 = vmatprep.subr.mxu0 0.0
    %910 = vmatpush1.msra.mxu0 0.0
    %911 = vmatprep.subr.mxu0 0.0
    %912 = vmatpush1.msra.mxu0 0.0
    %913 = vmatprep.subr.mxu0 0.0
    %914 = vmatpush1.msra.mxu0 0.0
    %915 = vmatprep.subr.mxu0 0.0
    %916 = vmatpush1.msra.mxu0 0.0
    %917 = vmatprep.subr.mxu0 0.0
    %918 = vmatpush1.msra.mxu0 0.0
    %919 = vmatprep.subr.mxu0 0.0
    %920 = vmatpush1.msra.mxu0 0.0
    %921 = vmatprep.subr.mxu0 0.0
    %922 = vmatpush1.msra.mxu0 0.0
    %923 = vmatprep.subr.mxu0 0.0
    %924 = vmatpush1.msra.mxu0 0.0
    %925 = vmatprep.subr.mxu0 0.0
    %926 = vmatpush1.msra.mxu0 0.0
    %927 = vmatprep.subr.mxu0 0.0
    %928 = vmatpush1.msra.mxu0 0.0
    %929 = vmatprep.subr.mxu0 0.0
    %v930 = vand.u32 %v523, 4294901760
    %931 = vmatpush1.msra.mxu0 %v930
    %932 = vmatprep.subr.mxu0 0.0
    %933 = vmatpush2.msra.mxu0 0.0
    %934 = vmatprep.subr.mxu0 0.0
    %935 = vmatpush2.msra.mxu0 0.0
    %936 = vmatprep.subr.mxu0 0.0
    %937 = vmatpush2.msra.mxu0 0.0
    %938 = vmatprep.subr.mxu0 0.0
    %939 = vmatpush2.msra.mxu0 0.0
    %940 = vmatprep.subr.mxu0 0.0
    %941 = vmatpush2.msra.mxu0 0.0
    %942 = vmatprep.subr.mxu0 0.0
    %943 = vmatpush2.msra.mxu0 0.0
    %944 = vmatprep.subr.mxu0 0.0
    %945 = vmatpush2.msra.mxu0 0.0
    %946 = vmatprep.subr.mxu0 0.0
    %947 = vmatpush2.msra.mxu0 0.0
    %948 = vmatprep.subr.mxu0 0.0
    %949 = vmatpush2.msra.mxu0 0.0
    %950 = vmatprep.subr.mxu0 0.0
    %951 = vmatpush2.msra.mxu0 0.0
    %952 = vmatprep.subr.mxu0 0.0
    %953 = vmatpush2.msra.mxu0 0.0
    %954 = vmatprep.subr.mxu0 0.0
    %955 = vmatpush2.msra.mxu0 0.0
    %956 = vmatprep.subr.mxu0 0.0
    %957 = vmatpush2.msra.mxu0 0.0
    %958 = vmatprep.subr.mxu0 0.0
    %959 = vmatpush2.msra.mxu0 0.0
    %960 = vmatprep.subr.mxu0 0.0
    %961 = vmatpush2.msra.mxu0 0.0
    %962 = vmatprep.subr.mxu0 0.0
    %963 = vmatpush2.msra.mxu0 0.0
    %964 = vmatprep.mubr.f32.mxu0 0.0
    %v965 = vand.u32 %v519, 4294901760
    %966 = vmatmul.mubr.f32.gmra.mxu0 %v965
    %v967 = vpop.f32.mrf.mxu0
    %v968 = vadd.f32 %v896, %v967
    %v969 = vpop.f32.mrf.mxu0
    %970 = vdwg.mxu0
    %v971 = vsub.f32 %v60, %v968
    %v972 = vmul.f32 %v971, %v971
    %v974 = vsel %vm63, %v972, 0
    %v976 = vsel %vm63, %v62, 0
    %978 = vmatprep.subr.mxu0 0.0
    %979 = vmatpush1.xpose.msra.mxu0 0.0
    %980 = vmatprep.subr.mxu0 0.0
    %981 = vmatpush1.xpose.msra.mxu0 0.0
    %982 = vmatprep.subr.mxu0 0.0
    %983 = vmatpush1.xpose.msra.mxu0 0.0
    %984 = vmatprep.subr.mxu0 0.0
    %985 = vmatpush1.xpose.msra.mxu0 0.0
    %986 = vmatprep.subr.mxu0 0.0
    %987 = vmatpush1.xpose.msra.mxu0 0.0
    %988 = vmatprep.subr.mxu0 0.0
    %989 = vmatpush1.xpose.msra.mxu0 0.0
    %990 = vmatprep.subr.mxu0 0.0
    %991 = vmatpush1.xpose.msra.mxu0 0.0
    %992 = vmatprep.subr.mxu0 0.0
    %993 = vmatpush1.xpose.msra.mxu0 0.0
    %994 = vmatprep.subr.mxu0 0.0
    %995 = vmatpush1.xpose.msra.mxu0 0.0
    %996 = vmatprep.subr.mxu0 0.0
    %997 = vmatpush1.xpose.msra.mxu0 0.0
    %998 = vmatprep.subr.mxu0 0.0
    %999 = vmatpush1.xpose.msra.mxu0 0.0
    %1000 = vmatprep.subr.mxu0 0.0
    %1001 = vmatpush1.xpose.msra.mxu0 0.0
    %1002 = vmatprep.subr.mxu0 0.0
    %1003 = vmatpush1.xpose.msra.mxu0 0.0
    %1004 = vmatprep.subr.mxu0 0.0
    %1005 = vmatpush1.xpose.msra.mxu0 0.0
    %1006 = vmatprep.subr.mxu0 0.0
    %1007 = vmatpush1.xpose.msra.mxu0 0.0
    %1008 = vmatprep.subr.mxu0 0.0
    %v1009 = vand.u32 %v976, 4294901760
    %1010 = vmatpush1.xpose.msra.mxu0 %v1009
    %1011 = vmatprep.subr.mxu0 0.0
    %1012 = vmatpush2.xpose.msra.mxu0 0.0
    %1013 = vmatprep.subr.mxu0 0.0
    %1014 = vmatpush2.xpose.msra.mxu0 0.0
    %1015 = vmatprep.subr.mxu0 0.0
    %1016 = vmatpush2.xpose.msra.mxu0 0.0
    %1017 = vmatprep.subr.mxu0 0.0
    %1018 = vmatpush2.xpose.msra.mxu0 0.0
    %1019 = vmatprep.subr.mxu0 0.0
    %1020 = vmatpush2.xpose.msra.mxu0 0.0
    %1021 = vmatprep.subr.mxu0 0.0
    %1022 = vmatpush2.xpose.msra.mxu0 0.0
    %1023 = vmatprep.subr.mxu0 0.0
    %1024 = vmatpush2.xpose.msra.mxu0 0.0
    %1025 = vmatprep.subr.mxu0 0.0
    %1026 = vmatpush2.xpose.msra.mxu0 0.0
    %1027 = vmatprep.subr.mxu0 0.0
    %1028 = vmatpush2.xpose.msra.mxu0 0.0
    %1029 = vmatprep.subr.mxu0 0.0
    %1030 = vmatpush2.xpose.msra.mxu0 0.0
    %1031 = vmatprep.subr.mxu0 0.0
    %1032 = vmatpush2.xpose.msra.mxu0 0.0
    %1033 = vmatprep.subr.mxu0 0.0
    %1034 = vmatpush2.xpose.msra.mxu0 0.0
    %1035 = vmatprep.subr.mxu0 0.0
    %1036 = vmatpush2.xpose.msra.mxu0 0.0
    %1037 = vmatprep.subr.mxu0 0.0
    %1038 = vmatpush2.xpose.msra.mxu0 0.0
    %1039 = vmatprep.subr.mxu0 0.0
    %1040 = vmatpush2.xpose.msra.mxu0 0.0
    %1041 = vmatprep.subr.mxu0 0.0
    %1042 = vmatpush2.xpose.msra.mxu0 0.0
    %1043 = vmatprep.mubr.f32.mxu0 0.0
    %v1044 = vand.u32 %v974, 4294901760
    %v1045 = vsub.f32 %v974, %v1044
    %v1046 = vand.u32 %v1045, 4294901760
    %v1047 = vsub.f32 %v1045, %v1046
    %v1048 = vand.u32 %v1047, 4294901760
    %1049 = vmatmul.mubr.f32.gmra.mxu0 %v1048
    %v1050 = vpop.f32.mrf.mxu0
    %v1051 = vadd.f32 0.0, %v1050
    %v1052 = vpop.f32.mrf.mxu0
    %1053 = vdwg.mxu0
    %1054 = vmatprep.subr.mxu0 0.0
    %1055 = vmatpush1.xpose.msra.mxu0 0.0
    %1056 = vmatprep.subr.mxu0 0.0
    %1057 = vmatpush1.xpose.msra.mxu0 0.0
    %1058 = vmatprep.subr.mxu0 0.0
    %1059 = vmatpush1.xpose.msra.mxu0 0.0
    %1060 = vmatprep.subr.mxu0 0.0
    %1061 = vmatpush1.xpose.msra.mxu0 0.0
    %1062 = vmatprep.subr.mxu0 0.0
    %1063 = vmatpush1.xpose.msra.mxu0 0.0
    %1064 = vmatprep.subr.mxu0 0.0
    %1065 = vmatpush1.xpose.msra.mxu0 0.0
    %1066 = vmatprep.subr.mxu0 0.0
    %1067 = vmatpush1.xpose.msra.mxu0 0.0
    %1068 = vmatprep.subr.mxu0 0.0
    %1069 = vmatpush1.xpose.msra.mxu0 0.0
    %1070 = vmatprep.subr.mxu0 0.0
    %1071 = vmatpush1.xpose.msra.mxu0 0.0
    %1072 = vmatprep.subr.mxu0 0.0
    %1073 = vmatpush1.xpose.msra.mxu0 0.0
    %1074 = vmatprep.subr.mxu0 0.0
    %1075 = vmatpush1.xpose.msra.mxu0 0.0
    %1076 = vmatprep.subr.mxu0 0.0
    %1077 = vmatpush1.xpose.msra.mxu0 0.0
    %1078 = vmatprep.subr.mxu0 0.0
    %1079 = vmatpush1.xpose.msra.mxu0 0.0
    %1080 = vmatprep.subr.mxu0 0.0
    %1081 = vmatpush1.xpose.msra.mxu0 0.0
    %1082 = vmatprep.subr.mxu0 0.0
    %1083 = vmatpush1.xpose.msra.mxu0 0.0
    %1084 = vmatprep.subr.mxu0 0.0
    %v1085 = vand.u32 %v976, 4294901760
    %v1086 = vsub.f32 %v976, %v1085
    %v1087 = vand.u32 %v1086, 4294901760
    %v1088 = vsub.f32 %v1086, %v1087
    %v1089 = vand.u32 %v1088, 4294901760
    %1090 = vmatpush1.xpose.msra.mxu0 %v1089
    %1091 = vmatprep.subr.mxu0 0.0
    %1092 = vmatpush2.xpose.msra.mxu0 0.0
    %1093 = vmatprep.subr.mxu0 0.0
    %1094 = vmatpush2.xpose.msra.mxu0 0.0
    %1095 = vmatprep.subr.mxu0 0.0
    %1096 = vmatpush2.xpose.msra.mxu0 0.0
    %1097 = vmatprep.subr.mxu0 0.0
    %1098 = vmatpush2.xpose.msra.mxu0 0.0
    %1099 = vmatprep.subr.mxu0 0.0
    %1100 = vmatpush2.xpose.msra.mxu0 0.0
    %1101 = vmatprep.subr.mxu0 0.0
    %1102 = vmatpush2.xpose.msra.mxu0 0.0
    %1103 = vmatprep.subr.mxu0 0.0
    %1104 = vmatpush2.xpose.msra.mxu0 0.0
    %1105 = vmatprep.subr.mxu0 0.0
    %1106 = vmatpush2.xpose.msra.mxu0 0.0
    %1107 = vmatprep.subr.mxu0 0.0
    %1108 = vmatpush2.xpose.msra.mxu0 0.0
    %1109 = vmatprep.subr.mxu0 0.0
    %1110 = vmatpush2.xpose.msra.mxu0 0.0
    %1111 = vmatprep.subr.mxu0 0.0
    %1112 = vmatpush2.xpose.msra.mxu0 0.0
    %1113 = vmatprep.subr.mxu0 0.0
    %1114 = vmatpush2.xpose.msra.mxu0 0.0
    %1115 = vmatprep.subr.mxu0 0.0
    %1116 = vmatpush2.xpose.msra.mxu0 0.0
    %1117 = vmatprep.subr.mxu0 0.0
    %1118 = vmatpush2.xpose.msra.mxu0 0.0
    %1119 = vmatprep.subr.mxu0 0.0
    %1120 = vmatpush2.xpose.msra.mxu0 0.0
    %1121 = vmatprep.subr.mxu0 0.0
    %1122 = vmatpush2.xpose.msra.mxu0 0.0
    %1123 = vmatprep.mubr.f32.mxu0 0.0
    %v1124 = vand.u32 %v974, 4294901760
    %1125 = vmatmul.mubr.f32.gmra.mxu0 %v1124
    %v1126 = vpop.f32.mrf.mxu0
    %v1127 = vadd.f32 %v1051, %v1126
    %v1128 = vpop.f32.mrf.mxu0
    %1129 = vdwg.mxu0
    %1130 = vmatprep.subr.mxu0 0.0
    %1131 = vmatpush1.xpose.msra.mxu0 0.0
    %1132 = vmatprep.subr.mxu0 0.0
    %1133 = vmatpush1.xpose.msra.mxu0 0.0
    %1134 = vmatprep.subr.mxu0 0.0
    %1135 = vmatpush1.xpose.msra.mxu0 0.0
    %1136 = vmatprep.subr.mxu0 0.0
    %1137 = vmatpush1.xpose.msra.mxu0 0.0
    %1138 = vmatprep.subr.mxu0 0.0
    %1139 = vmatpush1.xpose.msra.mxu0 0.0
    %1140 = vmatprep.subr.mxu0 0.0
    %1141 = vmatpush1.xpose.msra.mxu0 0.0
    %1142 = vmatprep.subr.mxu0 0.0
    %1143 = vmatpush1.xpose.msra.mxu0 0.0
    %1144 = vmatprep.subr.mxu0 0.0
    %1145 = vmatpush1.xpose.msra.mxu0 0.0
    %1146 = vmatprep.subr.mxu0 0.0
    %1147 = vmatpush1.xpose.msra.mxu0 0.0
    %1148 = vmatprep.subr.mxu0 0.0
    %1149 = vmatpush1.xpose.msra.mxu0 0.0
    %1150 = vmatprep.subr.mxu0 0.0
    %1151 = vmatpush1.xpose.msra.mxu0 0.0
    %1152 = vmatprep.subr.mxu0 0.0
    %1153 = vmatpush1.xpose.msra.mxu0 0.0
    %1154 = vmatprep.subr.mxu0 0.0
    %1155 = vmatpush1.xpose.msra.mxu0 0.0
    %1156 = vmatprep.subr.mxu0 0.0
    %1157 = vmatpush1.xpose.msra.mxu0 0.0
    %1158 = vmatprep.subr.mxu0 0.0
    %1159 = vmatpush1.xpose.msra.mxu0 0.0
    %1160 = vmatprep.subr.mxu0 0.0
    %v1161 = vand.u32 %v976, 4294901760
    %v1162 = vsub.f32 %v976, %v1161
    %1163 = vmatpush1.xpose.msra.mxu0 %v1162
    %1164 = vmatprep.subr.mxu0 0.0
    %1165 = vmatpush2.xpose.msra.mxu0 0.0
    %1166 = vmatprep.subr.mxu0 0.0
    %1167 = vmatpush2.xpose.msra.mxu0 0.0
    %1168 = vmatprep.subr.mxu0 0.0
    %1169 = vmatpush2.xpose.msra.mxu0 0.0
    %1170 = vmatprep.subr.mxu0 0.0
    %1171 = vmatpush2.xpose.msra.mxu0 0.0
    %1172 = vmatprep.subr.mxu0 0.0
    %1173 = vmatpush2.xpose.msra.mxu0 0.0
    %1174 = vmatprep.subr.mxu0 0.0
    %1175 = vmatpush2.xpose.msra.mxu0 0.0
    %1176 = vmatprep.subr.mxu0 0.0
    %1177 = vmatpush2.xpose.msra.mxu0 0.0
    %1178 = vmatprep.subr.mxu0 0.0
    %1179 = vmatpush2.xpose.msra.mxu0 0.0
    %1180 = vmatprep.subr.mxu0 0.0
    %1181 = vmatpush2.xpose.msra.mxu0 0.0
    %1182 = vmatprep.subr.mxu0 0.0
    %1183 = vmatpush2.xpose.msra.mxu0 0.0
    %1184 = vmatprep.subr.mxu0 0.0
    %1185 = vmatpush2.xpose.msra.mxu0 0.0
    %1186 = vmatprep.subr.mxu0 0.0
    %1187 = vmatpush2.xpose.msra.mxu0 0.0
    %1188 = vmatprep.subr.mxu0 0.0
    %1189 = vmatpush2.xpose.msra.mxu0 0.0
    %1190 = vmatprep.subr.mxu0 0.0
    %1191 = vmatpush2.xpose.msra.mxu0 0.0
    %1192 = vmatprep.subr.mxu0 0.0
    %1193 = vmatpush2.xpose.msra.mxu0 0.0
    %1194 = vmatprep.subr.mxu0 0.0
    %1195 = vmatpush2.xpose.msra.mxu0 0.0
    %1196 = vmatprep.mubr.f32.mxu0 0.0
    %v1197 = vand.u32 %v974, 4294901760
    %v1198 = vsub.f32 %v974, %v1197
    %1199 = vmatmul.mubr.f32.gmra.mxu0 %v1198
    %v1200 = vpop.f32.mrf.mxu0
    %v1201 = vadd.f32 %v1127, %v1200
    %v1202 = vpop.f32.mrf.mxu0
    %1203 = vdwg.mxu0
    %1204 = vmatprep.subr.mxu0 0.0
    %1205 = vmatpush1.xpose.msra.mxu0 0.0
    %1206 = vmatprep.subr.mxu0 0.0
    %1207 = vmatpush1.xpose.msra.mxu0 0.0
    %1208 = vmatprep.subr.mxu0 0.0
    %1209 = vmatpush1.xpose.msra.mxu0 0.0
    %1210 = vmatprep.subr.mxu0 0.0
    %1211 = vmatpush1.xpose.msra.mxu0 0.0
    %1212 = vmatprep.subr.mxu0 0.0
    %1213 = vmatpush1.xpose.msra.mxu0 0.0
    %1214 = vmatprep.subr.mxu0 0.0
    %1215 = vmatpush1.xpose.msra.mxu0 0.0
    %1216 = vmatprep.subr.mxu0 0.0
    %1217 = vmatpush1.xpose.msra.mxu0 0.0
    %1218 = vmatprep.subr.mxu0 0.0
    %1219 = vmatpush1.xpose.msra.mxu0 0.0
    %1220 = vmatprep.subr.mxu0 0.0
    %1221 = vmatpush1.xpose.msra.mxu0 0.0
    %1222 = vmatprep.subr.mxu0 0.0
    %1223 = vmatpush1.xpose.msra.mxu0 0.0
    %1224 = vmatprep.subr.mxu0 0.0
    %1225 = vmatpush1.xpose.msra.mxu0 0.0
    %1226 = vmatprep.subr.mxu0 0.0
    %1227 = vmatpush1.xpose.msra.mxu0 0.0
    %1228 = vmatprep.subr.mxu0 0.0
    %1229 = vmatpush1.xpose.msra.mxu0 0.0
    %1230 = vmatprep.subr.mxu0 0.0
    %1231 = vmatpush1.xpose.msra.mxu0 0.0
    %1232 = vmatprep.subr.mxu0 0.0
    %1233 = vmatpush1.xpose.msra.mxu0 0.0
    %1234 = vmatprep.subr.mxu0 0.0
    %v1235 = vand.u32 %v976, 4294901760
    %1236 = vmatpush1.xpose.msra.mxu0 %v1235
    %1237 = vmatprep.subr.mxu0 0.0
    %1238 = vmatpush2.xpose.msra.mxu0 0.0
    %1239 = vmatprep.subr.mxu0 0.0
    %1240 = vmatpush2.xpose.msra.mxu0 0.0
    %1241 = vmatprep.subr.mxu0 0.0
    %1242 = vmatpush2.xpose.msra.mxu0 0.0
    %1243 = vmatprep.subr.mxu0 0.0
    %1244 = vmatpush2.xpose.msra.mxu0 0.0
    %1245 = vmatprep.subr.mxu0 0.0
    %1246 = vmatpush2.xpose.msra.mxu0 0.0
    %1247 = vmatprep.subr.mxu0 0.0
    %1248 = vmatpush2.xpose.msra.mxu0 0.0
    %1249 = vmatprep.subr.mxu0 0.0
    %1250 = vmatpush2.xpose.msra.mxu0 0.0
    %1251 = vmatprep.subr.mxu0 0.0
    %1252 = vmatpush2.xpose.msra.mxu0 0.0
    %1253 = vmatprep.subr.mxu0 0.0
    %1254 = vmatpush2.xpose.msra.mxu0 0.0
    %1255 = vmatprep.subr.mxu0 0.0
    %1256 = vmatpush2.xpose.msra.mxu0 0.0
    %1257 = vmatprep.subr.mxu0 0.0
    %1258 = vmatpush2.xpose.msra.mxu0 0.0
    %1259 = vmatprep.subr.mxu0 0.0
    %1260 = vmatpush2.xpose.msra.mxu0 0.0
    %1261 = vmatprep.subr.mxu0 0.0
    %1262 = vmatpush2.xpose.msra.mxu0 0.0
    %1263 = vmatprep.subr.mxu0 0.0
    %1264 = vmatpush2.xpose.msra.mxu0 0.0
    %1265 = vmatprep.subr.mxu0 0.0
    %1266 = vmatpush2.xpose.msra.mxu0 0.0
    %1267 = vmatprep.subr.mxu0 0.0
    %1268 = vmatpush2.xpose.msra.mxu0 0.0
    %1269 = vmatprep.mubr.f32.mxu0 0.0
    %v1270 = vand.u32 %v974, 4294901760
    %v1271 = vsub.f32 %v974, %v1270
    %v1272 = vand.u32 %v1271, 4294901760
    %1273 = vmatmul.mubr.f32.gmra.mxu0 %v1272
    %v1274 = vpop.f32.mrf.mxu0
    %v1275 = vadd.f32 %v1201, %v1274
    %v1276 = vpop.f32.mrf.mxu0
    %1277 = vdwg.mxu0
    %1278 = vmatprep.subr.mxu0 0.0
    %1279 = vmatpush1.xpose.msra.mxu0 0.0
    %1280 = vmatprep.subr.mxu0 0.0
    %1281 = vmatpush1.xpose.msra.mxu0 0.0
    %1282 = vmatprep.subr.mxu0 0.0
    %1283 = vmatpush1.xpose.msra.mxu0 0.0
    %1284 = vmatprep.subr.mxu0 0.0
    %1285 = vmatpush1.xpose.msra.mxu0 0.0
    %1286 = vmatprep.subr.mxu0 0.0
    %1287 = vmatpush1.xpose.msra.mxu0 0.0
    %1288 = vmatprep.subr.mxu0 0.0
    %1289 = vmatpush1.xpose.msra.mxu0 0.0
    %1290 = vmatprep.subr.mxu0 0.0
    %1291 = vmatpush1.xpose.msra.mxu0 0.0
    %1292 = vmatprep.subr.mxu0 0.0
    %1293 = vmatpush1.xpose.msra.mxu0 0.0
    %1294 = vmatprep.subr.mxu0 0.0
    %1295 = vmatpush1.xpose.msra.mxu0 0.0
    %1296 = vmatprep.subr.mxu0 0.0
    %1297 = vmatpush1.xpose.msra.mxu0 0.0
    %1298 = vmatprep.subr.mxu0 0.0
    %1299 = vmatpush1.xpose.msra.mxu0 0.0
    %1300 = vmatprep.subr.mxu0 0.0
    %1301 = vmatpush1.xpose.msra.mxu0 0.0
    %1302 = vmatprep.subr.mxu0 0.0
    %1303 = vmatpush1.xpose.msra.mxu0 0.0
    %1304 = vmatprep.subr.mxu0 0.0
    %1305 = vmatpush1.xpose.msra.mxu0 0.0
    %1306 = vmatprep.subr.mxu0 0.0
    %1307 = vmatpush1.xpose.msra.mxu0 0.0
    %1308 = vmatprep.subr.mxu0 0.0
    %v1309 = vand.u32 %v976, 4294901760
    %v1310 = vsub.f32 %v976, %v1309
    %v1311 = vand.u32 %v1310, 4294901760
    %1312 = vmatpush1.xpose.msra.mxu0 %v1311
    %1313 = vmatprep.subr.mxu0 0.0
    %1314 = vmatpush2.xpose.msra.mxu0 0.0
    %1315 = vmatprep.subr.mxu0 0.0
    %1316 = vmatpush2.xpose.msra.mxu0 0.0
    %1317 = vmatprep.subr.mxu0 0.0
    %1318 = vmatpush2.xpose.msra.mxu0 0.0
    %1319 = vmatprep.subr.mxu0 0.0
    %1320 = vmatpush2.xpose.msra.mxu0 0.0
    %1321 = vmatprep.subr.mxu0 0.0
    %1322 = vmatpush2.xpose.msra.mxu0 0.0
    %1323 = vmatprep.subr.mxu0 0.0
    %1324 = vmatpush2.xpose.msra.mxu0 0.0
    %1325 = vmatprep.subr.mxu0 0.0
    %1326 = vmatpush2.xpose.msra.mxu0 0.0
    %1327 = vmatprep.subr.mxu0 0.0
    %1328 = vmatpush2.xpose.msra.mxu0 0.0
    %1329 = vmatprep.subr.mxu0 0.0
    %1330 = vmatpush2.xpose.msra.mxu0 0.0
    %1331 = vmatprep.subr.mxu0 0.0
    %1332 = vmatpush2.xpose.msra.mxu0 0.0
    %1333 = vmatprep.subr.mxu0 0.0
    %1334 = vmatpush2.xpose.msra.mxu0 0.0
    %1335 = vmatprep.subr.mxu0 0.0
    %1336 = vmatpush2.xpose.msra.mxu0 0.0
    %1337 = vmatprep.subr.mxu0 0.0
    %1338 = vmatpush2.xpose.msra.mxu0 0.0
    %1339 = vmatprep.subr.mxu0 0.0
    %1340 = vmatpush2.xpose.msra.mxu0 0.0
    %1341 = vmatprep.subr.mxu0 0.0
    %1342 = vmatpush2.xpose.msra.mxu0 0.0
    %1343 = vmatprep.subr.mxu0 0.0
    %1344 = vmatpush2.xpose.msra.mxu0 0.0
    %1345 = vmatprep.mubr.f32.mxu0 0.0
    %v1346 = vand.u32 %v974, 4294901760
    %1347 = vmatmul.mubr.f32.gmra.mxu0 %v1346
    %v1348 = vpop.f32.mrf.mxu0
    %v1349 = vadd.f32 %v1275, %v1348
    %v1350 = vpop.f32.mrf.mxu0
    %1351 = vdwg.mxu0
    %1352 = vmatprep.subr.mxu0 0.0
    %1353 = vmatpush1.xpose.msra.mxu0 0.0
    %1354 = vmatprep.subr.mxu0 0.0
    %1355 = vmatpush1.xpose.msra.mxu0 0.0
    %1356 = vmatprep.subr.mxu0 0.0
    %1357 = vmatpush1.xpose.msra.mxu0 0.0
    %1358 = vmatprep.subr.mxu0 0.0
    %1359 = vmatpush1.xpose.msra.mxu0 0.0
    %1360 = vmatprep.subr.mxu0 0.0
    %1361 = vmatpush1.xpose.msra.mxu0 0.0
    %1362 = vmatprep.subr.mxu0 0.0
    %1363 = vmatpush1.xpose.msra.mxu0 0.0
    %1364 = vmatprep.subr.mxu0 0.0
    %1365 = vmatpush1.xpose.msra.mxu0 0.0
    %1366 = vmatprep.subr.mxu0 0.0
    %1367 = vmatpush1.xpose.msra.mxu0 0.0
    %1368 = vmatprep.subr.mxu0 0.0
    %1369 = vmatpush1.xpose.msra.mxu0 0.0
    %1370 = vmatprep.subr.mxu0 0.0
    %1371 = vmatpush1.xpose.msra.mxu0 0.0
    %1372 = vmatprep.subr.mxu0 0.0
    %1373 = vmatpush1.xpose.msra.mxu0 0.0
    %1374 = vmatprep.subr.mxu0 0.0
    %1375 = vmatpush1.xpose.msra.mxu0 0.0
    %1376 = vmatprep.subr.mxu0 0.0
    %1377 = vmatpush1.xpose.msra.mxu0 0.0
    %1378 = vmatprep.subr.mxu0 0.0
    %1379 = vmatpush1.xpose.msra.mxu0 0.0
    %1380 = vmatprep.subr.mxu0 0.0
    %1381 = vmatpush1.xpose.msra.mxu0 0.0
    %1382 = vmatprep.subr.mxu0 0.0
    %v1383 = vand.u32 %v976, 4294901760
    %1384 = vmatpush1.xpose.msra.mxu0 %v1383
    %1385 = vmatprep.subr.mxu0 0.0
    %1386 = vmatpush2.xpose.msra.mxu0 0.0
    %1387 = vmatprep.subr.mxu0 0.0
    %1388 = vmatpush2.xpose.msra.mxu0 0.0
    %1389 = vmatprep.subr.mxu0 0.0
    %1390 = vmatpush2.xpose.msra.mxu0 0.0
    %1391 = vmatprep.subr.mxu0 0.0
    %1392 = vmatpush2.xpose.msra.mxu0 0.0
    %1393 = vmatprep.subr.mxu0 0.0
    %1394 = vmatpush2.xpose.msra.mxu0 0.0
    %1395 = vmatprep.subr.mxu0 0.0
    %1396 = vmatpush2.xpose.msra.mxu0 0.0
    %1397 = vmatprep.subr.mxu0 0.0
    %1398 = vmatpush2.xpose.msra.mxu0 0.0
    %1399 = vmatprep.subr.mxu0 0.0
    %1400 = vmatpush2.xpose.msra.mxu0 0.0
    %1401 = vmatprep.subr.mxu0 0.0
    %1402 = vmatpush2.xpose.msra.mxu0 0.0
    %1403 = vmatprep.subr.mxu0 0.0
    %1404 = vmatpush2.xpose.msra.mxu0 0.0
    %1405 = vmatprep.subr.mxu0 0.0
    %1406 = vmatpush2.xpose.msra.mxu0 0.0
    %1407 = vmatprep.subr.mxu0 0.0
    %1408 = vmatpush2.xpose.msra.mxu0 0.0
    %1409 = vmatprep.subr.mxu0 0.0
    %1410 = vmatpush2.xpose.msra.mxu0 0.0
    %1411 = vmatprep.subr.mxu0 0.0
    %1412 = vmatpush2.xpose.msra.mxu0 0.0
    %1413 = vmatprep.subr.mxu0 0.0
    %1414 = vmatpush2.xpose.msra.mxu0 0.0
    %1415 = vmatprep.subr.mxu0 0.0
    %1416 = vmatpush2.xpose.msra.mxu0 0.0
    %1417 = vmatprep.mubr.f32.mxu0 0.0
    %v1418 = vand.u32 %v974, 4294901760
    %1419 = vmatmul.mubr.f32.gmra.mxu0 %v1418
    %v1420 = vpop.f32.mrf.mxu0
    %v1421 = vadd.f32 %v1349, %v1420
    %v1422 = vpop.f32.mrf.mxu0
    %1423 = vdwg.mxu0
    %v1424 = vmul.f32 %v1421, 0.125
    %v1425 = vadd.f32 %v1424, 1e-05
    %v1426 = vrsqrt.pop %v1425
    %v1427 = vmul.f32 %v1425, %v1426
    %vm1428 = vcmp.eq.f32.partialorder %v1425, inf
    %v1429 = vsel %vm1428, %v1425, %v1427
    %vm1430 = vcmp.eq.f32.partialorder %v1425, 0.0
    %v1431 = vand.u32 %v1425, 2147483648
    %v1432 = vsel %vm1430, %v1431, %v1429
    %v1433 = vrcp.pop %v1432
    %v1434 = vmul.f32 1.0, %v1433
    %v1435 = vld [vmem:[%s3] sm:$0x1]
    %v1436 = vld [vmem:[%s4] sm:$0x1]
    %v1438 = vlaneseq
    %v1439 = vshrl.u32 %v1438, 7
    %v1440 = vsub.s32 0, %v1439
    %v1441 = vrot.slane %v1435, %v1440
    %v1443 = vmul.f32 %v1441, %v1434
    %v1445 = vsel %vm517, %v1443, 0
    %1447 = vmatprep.subr.mxu0 0.0
    %1448 = vmatpush1.msra.mxu0 0.0
    %1449 = vmatprep.subr.mxu0 0.0
    %1450 = vmatpush1.msra.mxu0 0.0
    %1451 = vmatprep.subr.mxu0 0.0
    %1452 = vmatpush1.msra.mxu0 0.0
    %1453 = vmatprep.subr.mxu0 0.0
    %1454 = vmatpush1.msra.mxu0 0.0
    %1455 = vmatprep.subr.mxu0 0.0
    %1456 = vmatpush1.msra.mxu0 0.0
    %1457 = vmatprep.subr.mxu0 0.0
    %1458 = vmatpush1.msra.mxu0 0.0
    %1459 = vmatprep.subr.mxu0 0.0
    %1460 = vmatpush1.msra.mxu0 0.0
    %1461 = vmatprep.subr.mxu0 0.0
    %1462 = vmatpush1.msra.mxu0 0.0
    %1463 = vmatprep.subr.mxu0 0.0
    %1464 = vmatpush1.msra.mxu0 0.0
    %1465 = vmatprep.subr.mxu0 0.0
    %1466 = vmatpush1.msra.mxu0 0.0
    %1467 = vmatprep.subr.mxu0 0.0
    %1468 = vmatpush1.msra.mxu0 0.0
    %1469 = vmatprep.subr.mxu0 0.0
    %1470 = vmatpush1.msra.mxu0 0.0
    %1471 = vmatprep.subr.mxu0 0.0
    %1472 = vmatpush1.msra.mxu0 0.0
    %1473 = vmatprep.subr.mxu0 0.0
    %1474 = vmatpush1.msra.mxu0 0.0
    %1475 = vmatprep.subr.mxu0 0.0
    %1476 = vmatpush1.msra.mxu0 0.0
    %1477 = vmatprep.subr.mxu0 0.0
    %v1478 = vand.u32 %v523, 4294901760
    %1479 = vmatpush1.msra.mxu0 %v1478
    %1480 = vmatprep.subr.mxu0 0.0
    %1481 = vmatpush2.msra.mxu0 0.0
    %1482 = vmatprep.subr.mxu0 0.0
    %1483 = vmatpush2.msra.mxu0 0.0
    %1484 = vmatprep.subr.mxu0 0.0
    %1485 = vmatpush2.msra.mxu0 0.0
    %1486 = vmatprep.subr.mxu0 0.0
    %1487 = vmatpush2.msra.mxu0 0.0
    %1488 = vmatprep.subr.mxu0 0.0
    %1489 = vmatpush2.msra.mxu0 0.0
    %1490 = vmatprep.subr.mxu0 0.0
    %1491 = vmatpush2.msra.mxu0 0.0
    %1492 = vmatprep.subr.mxu0 0.0
    %1493 = vmatpush2.msra.mxu0 0.0
    %1494 = vmatprep.subr.mxu0 0.0
    %1495 = vmatpush2.msra.mxu0 0.0
    %1496 = vmatprep.subr.mxu0 0.0
    %1497 = vmatpush2.msra.mxu0 0.0
    %1498 = vmatprep.subr.mxu0 0.0
    %1499 = vmatpush2.msra.mxu0 0.0
    %1500 = vmatprep.subr.mxu0 0.0
    %1501 = vmatpush2.msra.mxu0 0.0
    %1502 = vmatprep.subr.mxu0 0.0
    %1503 = vmatpush2.msra.mxu0 0.0
    %1504 = vmatprep.subr.mxu0 0.0
    %1505 = vmatpush2.msra.mxu0 0.0
    %1506 = vmatprep.subr.mxu0 0.0
    %1507 = vmatpush2.msra.mxu0 0.0
    %1508 = vmatprep.subr.mxu0 0.0
    %1509 = vmatpush2.msra.mxu0 0.0
    %1510 = vmatprep.subr.mxu0 0.0
    %1511 = vmatpush2.msra.mxu0 0.0
    %1512 = vmatprep.mubr.f32.mxu0 0.0
    %v1513 = vand.u32 %v1445, 4294901760
    %v1514 = vsub.f32 %v1445, %v1513
    %v1515 = vand.u32 %v1514, 4294901760
    %v1516 = vsub.f32 %v1514, %v1515
    %v1517 = vand.u32 %v1516, 4294901760
    %1518 = vmatmul.mubr.f32.gmra.mxu0 %v1517
    %v1519 = vpop.f32.mrf.mxu0
    %v1520 = vadd.f32 0.0, %v1519
    %v1521 = vpop.f32.mrf.mxu0
    %1522 = vdwg.mxu0
    %1523 = vmatprep.subr.mxu0 0.0
    %1524 = vmatpush1.msra.mxu0 0.0
    %1525 = vmatprep.subr.mxu0 0.0
    %1526 = vmatpush1.msra.mxu0 0.0
    %1527 = vmatprep.subr.mxu0 0.0
    %1528 = vmatpush1.msra.mxu0 0.0
    %1529 = vmatprep.subr.mxu0 0.0
    %1530 = vmatpush1.msra.mxu0 0.0
    %1531 = vmatprep.subr.mxu0 0.0
    %1532 = vmatpush1.msra.mxu0 0.0
    %1533 = vmatprep.subr.mxu0 0.0
    %1534 = vmatpush1.msra.mxu0 0.0
    %1535 = vmatprep.subr.mxu0 0.0
    %1536 = vmatpush1.msra.mxu0 0.0
    %1537 = vmatprep.subr.mxu0 0.0
    %1538 = vmatpush1.msra.mxu0 0.0
    %1539 = vmatprep.subr.mxu0 0.0
    %1540 = vmatpush1.msra.mxu0 0.0
    %1541 = vmatprep.subr.mxu0 0.0
    %1542 = vmatpush1.msra.mxu0 0.0
    %1543 = vmatprep.subr.mxu0 0.0
    %1544 = vmatpush1.msra.mxu0 0.0
    %1545 = vmatprep.subr.mxu0 0.0
    %1546 = vmatpush1.msra.mxu0 0.0
    %1547 = vmatprep.subr.mxu0 0.0
    %1548 = vmatpush1.msra.mxu0 0.0
    %1549 = vmatprep.subr.mxu0 0.0
    %1550 = vmatpush1.msra.mxu0 0.0
    %1551 = vmatprep.subr.mxu0 0.0
    %1552 = vmatpush1.msra.mxu0 0.0
    %1553 = vmatprep.subr.mxu0 0.0
    %v1554 = vand.u32 %v523, 4294901760
    %v1555 = vsub.f32 %v523, %v1554
    %v1556 = vand.u32 %v1555, 4294901760
    %v1557 = vsub.f32 %v1555, %v1556
    %v1558 = vand.u32 %v1557, 4294901760
    %1559 = vmatpush1.msra.mxu0 %v1558
    %1560 = vmatprep.subr.mxu0 0.0
    %1561 = vmatpush2.msra.mxu0 0.0
    %1562 = vmatprep.subr.mxu0 0.0
    %1563 = vmatpush2.msra.mxu0 0.0
    %1564 = vmatprep.subr.mxu0 0.0
    %1565 = vmatpush2.msra.mxu0 0.0
    %1566 = vmatprep.subr.mxu0 0.0
    %1567 = vmatpush2.msra.mxu0 0.0
    %1568 = vmatprep.subr.mxu0 0.0
    %1569 = vmatpush2.msra.mxu0 0.0
    %1570 = vmatprep.subr.mxu0 0.0
    %1571 = vmatpush2.msra.mxu0 0.0
    %1572 = vmatprep.subr.mxu0 0.0
    %1573 = vmatpush2.msra.mxu0 0.0
    %1574 = vmatprep.subr.mxu0 0.0
    %1575 = vmatpush2.msra.mxu0 0.0
    %1576 = vmatprep.subr.mxu0 0.0
    %1577 = vmatpush2.msra.mxu0 0.0
    %1578 = vmatprep.subr.mxu0 0.0
    %1579 = vmatpush2.msra.mxu0 0.0
    %1580 = vmatprep.subr.mxu0 0.0
    %1581 = vmatpush2.msra.mxu0 0.0
    %1582 = vmatprep.subr.mxu0 0.0
    %1583 = vmatpush2.msra.mxu0 0.0
    %1584 = vmatprep.subr.mxu0 0.0
    %1585 = vmatpush2.msra.mxu0 0.0
    %1586 = vmatprep.subr.mxu0 0.0
    %1587 = vmatpush2.msra.mxu0 0.0
    %1588 = vmatprep.subr.mxu0 0.0
    %1589 = vmatpush2.msra.mxu0 0.0
    %1590 = vmatprep.subr.mxu0 0.0
    %1591 = vmatpush2.msra.mxu0 0.0
    %1592 = vmatprep.mubr.f32.mxu0 0.0
    %v1593 = vand.u32 %v1445, 4294901760
    %1594 = vmatmul.mubr.f32.gmra.mxu0 %v1593
    %v1595 = vpop.f32.mrf.mxu0
    %v1596 = vadd.f32 %v1520, %v1595
    %v1597 = vpop.f32.mrf.mxu0
    %1598 = vdwg.mxu0
    %1599 = vmatprep.subr.mxu0 0.0
    %1600 = vmatpush1.msra.mxu0 0.0
    %1601 = vmatprep.subr.mxu0 0.0
    %1602 = vmatpush1.msra.mxu0 0.0
    %1603 = vmatprep.subr.mxu0 0.0
    %1604 = vmatpush1.msra.mxu0 0.0
    %1605 = vmatprep.subr.mxu0 0.0
    %1606 = vmatpush1.msra.mxu0 0.0
    %1607 = vmatprep.subr.mxu0 0.0
    %1608 = vmatpush1.msra.mxu0 0.0
    %1609 = vmatprep.subr.mxu0 0.0
    %1610 = vmatpush1.msra.mxu0 0.0
    %1611 = vmatprep.subr.mxu0 0.0
    %1612 = vmatpush1.msra.mxu0 0.0
    %1613 = vmatprep.subr.mxu0 0.0
    %1614 = vmatpush1.msra.mxu0 0.0
    %1615 = vmatprep.subr.mxu0 0.0
    %1616 = vmatpush1.msra.mxu0 0.0
    %1617 = vmatprep.subr.mxu0 0.0
    %1618 = vmatpush1.msra.mxu0 0.0
    %1619 = vmatprep.subr.mxu0 0.0
    %1620 = vmatpush1.msra.mxu0 0.0
    %1621 = vmatprep.subr.mxu0 0.0
    %1622 = vmatpush1.msra.mxu0 0.0
    %1623 = vmatprep.subr.mxu0 0.0
    %1624 = vmatpush1.msra.mxu0 0.0
    %1625 = vmatprep.subr.mxu0 0.0
    %1626 = vmatpush1.msra.mxu0 0.0
    %1627 = vmatprep.subr.mxu0 0.0
    %1628 = vmatpush1.msra.mxu0 0.0
    %1629 = vmatprep.subr.mxu0 0.0
    %v1630 = vand.u32 %v523, 4294901760
    %v1631 = vsub.f32 %v523, %v1630
    %1632 = vmatpush1.msra.mxu0 %v1631
    %1633 = vmatprep.subr.mxu0 0.0
    %1634 = vmatpush2.msra.mxu0 0.0
    %1635 = vmatprep.subr.mxu0 0.0
    %1636 = vmatpush2.msra.mxu0 0.0
    %1637 = vmatprep.subr.mxu0 0.0
    %1638 = vmatpush2.msra.mxu0 0.0
    %1639 = vmatprep.subr.mxu0 0.0
    %1640 = vmatpush2.msra.mxu0 0.0
    %1641 = vmatprep.subr.mxu0 0.0
    %1642 = vmatpush2.msra.mxu0 0.0
    %1643 = vmatprep.subr.mxu0 0.0
    %1644 = vmatpush2.msra.mxu0 0.0
    %1645 = vmatprep.subr.mxu0 0.0
    %1646 = vmatpush2.msra.mxu0 0.0
    %1647 = vmatprep.subr.mxu0 0.0
    %1648 = vmatpush2.msra.mxu0 0.0
    %1649 = vmatprep.subr.mxu0 0.0
    %1650 = vmatpush2.msra.mxu0 0.0
    %1651 = vmatprep.subr.mxu0 0.0
    %1652 = vmatpush2.msra.mxu0 0.0
    %1653 = vmatprep.subr.mxu0 0.0
    %1654 = vmatpush2.msra.mxu0 0.0
    %1655 = vmatprep.subr.mxu0 0.0
    %1656 = vmatpush2.msra.mxu0 0.0
    %1657 = vmatprep.subr.mxu0 0.0
    %1658 = vmatpush2.msra.mxu0 0.0
    %1659 = vmatprep.subr.mxu0 0.0
    %1660 = vmatpush2.msra.mxu0 0.0
    %1661 = vmatprep.subr.mxu0 0.0
    %1662 = vmatpush2.msra.mxu0 0.0
    %1663 = vmatprep.subr.mxu0 0.0
    %1664 = vmatpush2.msra.mxu0 0.0
    %1665 = vmatprep.mubr.f32.mxu0 0.0
    %v1666 = vand.u32 %v1445, 4294901760
    %v1667 = vsub.f32 %v1445, %v1666
    %1668 = vmatmul.mubr.f32.gmra.mxu0 %v1667
    %v1669 = vpop.f32.mrf.mxu0
    %v1670 = vadd.f32 %v1596, %v1669
    %v1671 = vpop.f32.mrf.mxu0
    %1672 = vdwg.mxu0
    %1673 = vmatprep.subr.mxu0 0.0
    %1674 = vmatpush1.msra.mxu0 0.0
    %1675 = vmatprep.subr.mxu0 0.0
    %1676 = vmatpush1.msra.mxu0 0.0
    %1677 = vmatprep.subr.mxu0 0.0
    %1678 = vmatpush1.msra.mxu0 0.0
    %1679 = vmatprep.subr.mxu0 0.0
    %1680 = vmatpush1.msra.mxu0 0.0
    %1681 = vmatprep.subr.mxu0 0.0
    %1682 = vmatpush1.msra.mxu0 0.0
    %1683 = vmatprep.subr.mxu0 0.0
    %1684 = vmatpush1.msra.mxu0 0.0
    %1685 = vmatprep.subr.mxu0 0.0
    %1686 = vmatpush1.msra.mxu0 0.0
    %1687 = vmatprep.subr.mxu0 0.0
    %1688 = vmatpush1.msra.mxu0 0.0
    %1689 = vmatprep.subr.mxu0 0.0
    %1690 = vmatpush1.msra.mxu0 0.0
    %1691 = vmatprep.subr.mxu0 0.0
    %1692 = vmatpush1.msra.mxu0 0.0
    %1693 = vmatprep.subr.mxu0 0.0
    %1694 = vmatpush1.msra.mxu0 0.0
    %1695 = vmatprep.subr.mxu0 0.0
    %1696 = vmatpush1.msra.mxu0 0.0
    %1697 = vmatprep.subr.mxu0 0.0
    %1698 = vmatpush1.msra.mxu0 0.0
    %1699 = vmatprep.subr.mxu0 0.0
    %1700 = vmatpush1.msra.mxu0 0.0
    %1701 = vmatprep.subr.mxu0 0.0
    %1702 = vmatpush1.msra.mxu0 0.0
    %1703 = vmatprep.subr.mxu0 0.0
    %v1704 = vand.u32 %v523, 4294901760
    %1705 = vmatpush1.msra.mxu0 %v1704
    %1706 = vmatprep.subr.mxu0 0.0
    %1707 = vmatpush2.msra.mxu0 0.0
    %1708 = vmatprep.subr.mxu0 0.0
    %1709 = vmatpush2.msra.mxu0 0.0
    %1710 = vmatprep.subr.mxu0 0.0
    %1711 = vmatpush2.msra.mxu0 0.0
    %1712 = vmatprep.subr.mxu0 0.0
    %1713 = vmatpush2.msra.mxu0 0.0
    %1714 = vmatprep.subr.mxu0 0.0
    %1715 = vmatpush2.msra.mxu0 0.0
    %1716 = vmatprep.subr.mxu0 0.0
    %1717 = vmatpush2.msra.mxu0 0.0
    %1718 = vmatprep.subr.mxu0 0.0
    %1719 = vmatpush2.msra.mxu0 0.0
    %1720 = vmatprep.subr.mxu0 0.0
    %1721 = vmatpush2.msra.mxu0 0.0
    %1722 = vmatprep.subr.mxu0 0.0
    %1723 = vmatpush2.msra.mxu0 0.0
    %1724 = vmatprep.subr.mxu0 0.0
    %1725 = vmatpush2.msra.mxu0 0.0
    %1726 = vmatprep.subr.mxu0 0.0
    %1727 = vmatpush2.msra.mxu0 0.0
    %1728 = vmatprep.subr.mxu0 0.0
    %1729 = vmatpush2.msra.mxu0 0.0
    %1730 = vmatprep.subr.mxu0 0.0
    %1731 = vmatpush2.msra.mxu0 0.0
    %1732 = vmatprep.subr.mxu0 0.0
    %1733 = vmatpush2.msra.mxu0 0.0
    %1734 = vmatprep.subr.mxu0 0.0
    %1735 = vmatpush2.msra.mxu0 0.0
    %1736 = vmatprep.subr.mxu0 0.0
    %1737 = vmatpush2.msra.mxu0 0.0
    %1738 = vmatprep.mubr.f32.mxu0 0.0
    %v1739 = vand.u32 %v1445, 4294901760
    %v1740 = vsub.f32 %v1445, %v1739
    %v1741 = vand.u32 %v1740, 4294901760
    %1742 = vmatmul.mubr.f32.gmra.mxu0 %v1741
    %v1743 = vpop.f32.mrf.mxu0
    %v1744 = vadd.f32 %v1670, %v1743
    %v1745 = vpop.f32.mrf.mxu0
    %1746 = vdwg.mxu0
    %1747 = vmatprep.subr.mxu0 0.0
    %1748 = vmatpush1.msra.mxu0 0.0
    %1749 = vmatprep.subr.mxu0 0.0
    %1750 = vmatpush1.msra.mxu0 0.0
    %1751 = vmatprep.subr.mxu0 0.0
    %1752 = vmatpush1.msra.mxu0 0.0
    %1753 = vmatprep.subr.mxu0 0.0
    %1754 = vmatpush1.msra.mxu0 0.0
    %1755 = vmatprep.subr.mxu0 0.0
    %1756 = vmatpush1.msra.mxu0 0.0
    %1757 = vmatprep.subr.mxu0 0.0
    %1758 = vmatpush1.msra.mxu0 0.0
    %1759 = vmatprep.subr.mxu0 0.0
    %1760 = vmatpush1.msra.mxu0 0.0
    %1761 = vmatprep.subr.mxu0 0.0
    %1762 = vmatpush1.msra.mxu0 0.0
    %1763 = vmatprep.subr.mxu0 0.0
    %1764 = vmatpush1.msra.mxu0 0.0
    %1765 = vmatprep.subr.mxu0 0.0
    %1766 = vmatpush1.msra.mxu0 0.0
    %1767 = vmatprep.subr.mxu0 0.0
    %1768 = vmatpush1.msra.mxu0 0.0
    %1769 = vmatprep.subr.mxu0 0.0
    %1770 = vmatpush1.msra.mxu0 0.0
    %1771 = vmatprep.subr.mxu0 0.0
    %1772 = vmatpush1.msra.mxu0 0.0
    %1773 = vmatprep.subr.mxu0 0.0
    %1774 = vmatpush1.msra.mxu0 0.0
    %1775 = vmatprep.subr.mxu0 0.0
    %1776 = vmatpush1.msra.mxu0 0.0
    %1777 = vmatprep.subr.mxu0 0.0
    %v1778 = vand.u32 %v523, 4294901760
    %v1779 = vsub.f32 %v523, %v1778
    %v1780 = vand.u32 %v1779, 4294901760
    %1781 = vmatpush1.msra.mxu0 %v1780
    %1782 = vmatprep.subr.mxu0 0.0
    %1783 = vmatpush2.msra.mxu0 0.0
    %1784 = vmatprep.subr.mxu0 0.0
    %1785 = vmatpush2.msra.mxu0 0.0
    %1786 = vmatprep.subr.mxu0 0.0
    %1787 = vmatpush2.msra.mxu0 0.0
    %1788 = vmatprep.subr.mxu0 0.0
    %1789 = vmatpush2.msra.mxu0 0.0
    %1790 = vmatprep.subr.mxu0 0.0
    %1791 = vmatpush2.msra.mxu0 0.0
    %1792 = vmatprep.subr.mxu0 0.0
    %1793 = vmatpush2.msra.mxu0 0.0
    %1794 = vmatprep.subr.mxu0 0.0
    %1795 = vmatpush2.msra.mxu0 0.0
    %1796 = vmatprep.subr.mxu0 0.0
    %1797 = vmatpush2.msra.mxu0 0.0
    %1798 = vmatprep.subr.mxu0 0.0
    %1799 = vmatpush2.msra.mxu0 0.0
    %1800 = vmatprep.subr.mxu0 0.0
    %1801 = vmatpush2.msra.mxu0 0.0
    %1802 = vmatprep.subr.mxu0 0.0
    %1803 = vmatpush2.msra.mxu0 0.0
    %1804 = vmatprep.subr.mxu0 0.0
    %1805 = vmatpush2.msra.mxu0 0.0
    %1806 = vmatprep.subr.mxu0 0.0
    %1807 = vmatpush2.msra.mxu0 0.0
    %1808 = vmatprep.subr.mxu0 0.0
    %1809 = vmatpush2.msra.mxu0 0.0
    %1810 = vmatprep.subr.mxu0 0.0
    %1811 = vmatpush2.msra.mxu0 0.0
    %1812 = vmatprep.subr.mxu0 0.0
    %1813 = vmatpush2.msra.mxu0 0.0
    %1814 = vmatprep.mubr.f32.mxu0 0.0
    %v1815 = vand.u32 %v1445, 4294901760
    %1816 = vmatmul.mubr.f32.gmra.mxu0 %v1815
    %v1817 = vpop.f32.mrf.mxu0
    %v1818 = vadd.f32 %v1744, %v1817
    %v1819 = vpop.f32.mrf.mxu0
    %1820 = vdwg.mxu0
    %1821 = vmatprep.subr.mxu0 0.0
    %1822 = vmatpush1.msra.mxu0 0.0
    %1823 = vmatprep.subr.mxu0 0.0
    %1824 = vmatpush1.msra.mxu0 0.0
    %1825 = vmatprep.subr.mxu0 0.0
    %1826 = vmatpush1.msra.mxu0 0.0
    %1827 = vmatprep.subr.mxu0 0.0
    %1828 = vmatpush1.msra.mxu0 0.0
    %1829 = vmatprep.subr.mxu0 0.0
    %1830 = vmatpush1.msra.mxu0 0.0
    %1831 = vmatprep.subr.mxu0 0.0
    %1832 = vmatpush1.msra.mxu0 0.0
    %1833 = vmatprep.subr.mxu0 0.0
    %1834 = vmatpush1.msra.mxu0 0.0
    %1835 = vmatprep.subr.mxu0 0.0
    %1836 = vmatpush1.msra.mxu0 0.0
    %1837 = vmatprep.subr.mxu0 0.0
    %1838 = vmatpush1.msra.mxu0 0.0
    %1839 = vmatprep.subr.mxu0 0.0
    %1840 = vmatpush1.msra.mxu0 0.0
    %1841 = vmatprep.subr.mxu0 0.0
    %1842 = vmatpush1.msra.mxu0 0.0
    %1843 = vmatprep.subr.mxu0 0.0
    %1844 = vmatpush1.msra.mxu0 0.0
    %1845 = vmatprep.subr.mxu0 0.0
    %1846 = vmatpush1.msra.mxu0 0.0
    %1847 = vmatprep.subr.mxu0 0.0
    %1848 = vmatpush1.msra.mxu0 0.0
    %1849 = vmatprep.subr.mxu0 0.0
    %1850 = vmatpush1.msra.mxu0 0.0
    %1851 = vmatprep.subr.mxu0 0.0
    %v1852 = vand.u32 %v523, 4294901760
    %1853 = vmatpush1.msra.mxu0 %v1852
    %1854 = vmatprep.subr.mxu0 0.0
    %1855 = vmatpush2.msra.mxu0 0.0
    %1856 = vmatprep.subr.mxu0 0.0
    %1857 = vmatpush2.msra.mxu0 0.0
    %1858 = vmatprep.subr.mxu0 0.0
    %1859 = vmatpush2.msra.mxu0 0.0
    %1860 = vmatprep.subr.mxu0 0.0
    %1861 = vmatpush2.msra.mxu0 0.0
    %1862 = vmatprep.subr.mxu0 0.0
    %1863 = vmatpush2.msra.mxu0 0.0
    %1864 = vmatprep.subr.mxu0 0.0
    %1865 = vmatpush2.msra.mxu0 0.0
    %1866 = vmatprep.subr.mxu0 0.0
    %1867 = vmatpush2.msra.mxu0 0.0
    %1868 = vmatprep.subr.mxu0 0.0
    %1869 = vmatpush2.msra.mxu0 0.0
    %1870 = vmatprep.subr.mxu0 0.0
    %1871 = vmatpush2.msra.mxu0 0.0
    %1872 = vmatprep.subr.mxu0 0.0
    %1873 = vmatpush2.msra.mxu0 0.0
    %1874 = vmatprep.subr.mxu0 0.0
    %1875 = vmatpush2.msra.mxu0 0.0
    %1876 = vmatprep.subr.mxu0 0.0
    %1877 = vmatpush2.msra.mxu0 0.0
    %1878 = vmatprep.subr.mxu0 0.0
    %1879 = vmatpush2.msra.mxu0 0.0
    %1880 = vmatprep.subr.mxu0 0.0
    %1881 = vmatpush2.msra.mxu0 0.0
    %1882 = vmatprep.subr.mxu0 0.0
    %1883 = vmatpush2.msra.mxu0 0.0
    %1884 = vmatprep.subr.mxu0 0.0
    %1885 = vmatpush2.msra.mxu0 0.0
    %1886 = vmatprep.mubr.f32.mxu0 0.0
    %v1887 = vand.u32 %v1445, 4294901760
    %1888 = vmatmul.mubr.f32.gmra.mxu0 %v1887
    %v1889 = vpop.f32.mrf.mxu0
    %v1890 = vadd.f32 %v1818, %v1889
    %v1891 = vpop.f32.mrf.mxu0
    %1892 = vdwg.mxu0
    %v1894 = vsel %vm517, %v1436, 0
    %1896 = vmatprep.subr.mxu0 0.0
    %1897 = vmatpush1.msra.mxu0 0.0
    %1898 = vmatprep.subr.mxu0 0.0
    %1899 = vmatpush1.msra.mxu0 0.0
    %1900 = vmatprep.subr.mxu0 0.0
    %1901 = vmatpush1.msra.mxu0 0.0
    %1902 = vmatprep.subr.mxu0 0.0
    %1903 = vmatpush1.msra.mxu0 0.0
    %1904 = vmatprep.subr.mxu0 0.0
    %1905 = vmatpush1.msra.mxu0 0.0
    %1906 = vmatprep.subr.mxu0 0.0
    %1907 = vmatpush1.msra.mxu0 0.0
    %1908 = vmatprep.subr.mxu0 0.0
    %1909 = vmatpush1.msra.mxu0 0.0
    %1910 = vmatprep.subr.mxu0 0.0
    %1911 = vmatpush1.msra.mxu0 0.0
    %1912 = vmatprep.subr.mxu0 0.0
    %1913 = vmatpush1.msra.mxu0 0.0
    %1914 = vmatprep.subr.mxu0 0.0
    %1915 = vmatpush1.msra.mxu0 0.0
    %1916 = vmatprep.subr.mxu0 0.0
    %1917 = vmatpush1.msra.mxu0 0.0
    %1918 = vmatprep.subr.mxu0 0.0
    %1919 = vmatpush1.msra.mxu0 0.0
    %1920 = vmatprep.subr.mxu0 0.0
    %1921 = vmatpush1.msra.mxu0 0.0
    %1922 = vmatprep.subr.mxu0 0.0
    %1923 = vmatpush1.msra.mxu0 0.0
    %1924 = vmatprep.subr.mxu0 0.0
    %1925 = vmatpush1.msra.mxu0 0.0
    %1926 = vmatprep.subr.mxu0 0.0
    %v1927 = vand.u32 %v523, 4294901760
    %1928 = vmatpush1.msra.mxu0 %v1927
    %1929 = vmatprep.subr.mxu0 0.0
    %1930 = vmatpush2.msra.mxu0 0.0
    %1931 = vmatprep.subr.mxu0 0.0
    %1932 = vmatpush2.msra.mxu0 0.0
    %1933 = vmatprep.subr.mxu0 0.0
    %1934 = vmatpush2.msra.mxu0 0.0
    %1935 = vmatprep.subr.mxu0 0.0
    %1936 = vmatpush2.msra.mxu0 0.0
    %1937 = vmatprep.subr.mxu0 0.0
    %1938 = vmatpush2.msra.mxu0 0.0
    %1939 = vmatprep.subr.mxu0 0.0
    %1940 = vmatpush2.msra.mxu0 0.0
    %1941 = vmatprep.subr.mxu0 0.0
    %1942 = vmatpush2.msra.mxu0 0.0
    %1943 = vmatprep.subr.mxu0 0.0
    %1944 = vmatpush2.msra.mxu0 0.0
    %1945 = vmatprep.subr.mxu0 0.0
    %1946 = vmatpush2.msra.mxu0 0.0
    %1947 = vmatprep.subr.mxu0 0.0
    %1948 = vmatpush2.msra.mxu0 0.0
    %1949 = vmatprep.subr.mxu0 0.0
    %1950 = vmatpush2.msra.mxu0 0.0
    %1951 = vmatprep.subr.mxu0 0.0
    %1952 = vmatpush2.msra.mxu0 0.0
    %1953 = vmatprep.subr.mxu0 0.0
    %1954 = vmatpush2.msra.mxu0 0.0
    %1955 = vmatprep.subr.mxu0 0.0
    %1956 = vmatpush2.msra.mxu0 0.0
    %1957 = vmatprep.subr.mxu0 0.0
    %1958 = vmatpush2.msra.mxu0 0.0
    %1959 = vmatprep.subr.mxu0 0.0
    %1960 = vmatpush2.msra.mxu0 0.0
    %1961 = vmatprep.mubr.f32.mxu0 0.0
    %v1962 = vand.u32 %v1894, 4294901760
    %v1963 = vsub.f32 %v1894, %v1962
    %v1964 = vand.u32 %v1963, 4294901760
    %v1965 = vsub.f32 %v1963, %v1964
    %v1966 = vand.u32 %v1965, 4294901760
    %1967 = vmatmul.mubr.f32.gmra.mxu0 %v1966
    %v1968 = vpop.f32.mrf.mxu0
    %v1969 = vadd.f32 0.0, %v1968
    %v1970 = vpop.f32.mrf.mxu0
    %1971 = vdwg.mxu0
    %1972 = vmatprep.subr.mxu0 0.0
    %1973 = vmatpush1.msra.mxu0 0.0
    %1974 = vmatprep.subr.mxu0 0.0
    %1975 = vmatpush1.msra.mxu0 0.0
    %1976 = vmatprep.subr.mxu0 0.0
    %1977 = vmatpush1.msra.mxu0 0.0
    %1978 = vmatprep.subr.mxu0 0.0
    %1979 = vmatpush1.msra.mxu0 0.0
    %1980 = vmatprep.subr.mxu0 0.0
    %1981 = vmatpush1.msra.mxu0 0.0
    %1982 = vmatprep.subr.mxu0 0.0
    %1983 = vmatpush1.msra.mxu0 0.0
    %1984 = vmatprep.subr.mxu0 0.0
    %1985 = vmatpush1.msra.mxu0 0.0
    %1986 = vmatprep.subr.mxu0 0.0
    %1987 = vmatpush1.msra.mxu0 0.0
    %1988 = vmatprep.subr.mxu0 0.0
    %1989 = vmatpush1.msra.mxu0 0.0
    %1990 = vmatprep.subr.mxu0 0.0
    %1991 = vmatpush1.msra.mxu0 0.0
    %1992 = vmatprep.subr.mxu0 0.0
    %1993 = vmatpush1.msra.mxu0 0.0
    %1994 = vmatprep.subr.mxu0 0.0
    %1995 = vmatpush1.msra.mxu0 0.0
    %1996 = vmatprep.subr.mxu0 0.0
    %1997 = vmatpush1.msra.mxu0 0.0
    %1998 = vmatprep.subr.mxu0 0.0
    %1999 = vmatpush1.msra.mxu0 0.0
    %2000 = vmatprep.subr.mxu0 0.0
    %2001 = vmatpush1.msra.mxu0 0.0
    %2002 = vmatprep.subr.mxu0 0.0
    %v2003 = vand.u32 %v523, 4294901760
    %v2004 = vsub.f32 %v523, %v2003
    %v2005 = vand.u32 %v2004, 4294901760
    %v2006 = vsub.f32 %v2004, %v2005
    %v2007 = vand.u32 %v2006, 4294901760
    %2008 = vmatpush1.msra.mxu0 %v2007
    %2009 = vmatprep.subr.mxu0 0.0
    %2010 = vmatpush2.msra.mxu0 0.0
    %2011 = vmatprep.subr.mxu0 0.0
    %2012 = vmatpush2.msra.mxu0 0.0
    %2013 = vmatprep.subr.mxu0 0.0
    %2014 = vmatpush2.msra.mxu0 0.0
    %2015 = vmatprep.subr.mxu0 0.0
    %2016 = vmatpush2.msra.mxu0 0.0
    %2017 = vmatprep.subr.mxu0 0.0
    %2018 = vmatpush2.msra.mxu0 0.0
    %2019 = vmatprep.subr.mxu0 0.0
    %2020 = vmatpush2.msra.mxu0 0.0
    %2021 = vmatprep.subr.mxu0 0.0
    %2022 = vmatpush2.msra.mxu0 0.0
    %2023 = vmatprep.subr.mxu0 0.0
    %2024 = vmatpush2.msra.mxu0 0.0
    %2025 = vmatprep.subr.mxu0 0.0
    %2026 = vmatpush2.msra.mxu0 0.0
    %2027 = vmatprep.subr.mxu0 0.0
    %2028 = vmatpush2.msra.mxu0 0.0
    %2029 = vmatprep.subr.mxu0 0.0
    %2030 = vmatpush2.msra.mxu0 0.0
    %2031 = vmatprep.subr.mxu0 0.0
    %2032 = vmatpush2.msra.mxu0 0.0
    %2033 = vmatprep.subr.mxu0 0.0
    %2034 = vmatpush2.msra.mxu0 0.0
    %2035 = vmatprep.subr.mxu0 0.0
    %2036 = vmatpush2.msra.mxu0 0.0
    %2037 = vmatprep.subr.mxu0 0.0
    %2038 = vmatpush2.msra.mxu0 0.0
    %2039 = vmatprep.subr.mxu0 0.0
    %2040 = vmatpush2.msra.mxu0 0.0
    %2041 = vmatprep.mubr.f32.mxu0 0.0
    %v2042 = vand.u32 %v1894, 4294901760
    %2043 = vmatmul.mubr.f32.gmra.mxu0 %v2042
    %v2044 = vpop.f32.mrf.mxu0
    %v2045 = vadd.f32 %v1969, %v2044
    %v2046 = vpop.f32.mrf.mxu0
    %2047 = vdwg.mxu0
    %2048 = vmatprep.subr.mxu0 0.0
    %2049 = vmatpush1.msra.mxu0 0.0
    %2050 = vmatprep.subr.mxu0 0.0
    %2051 = vmatpush1.msra.mxu0 0.0
    %2052 = vmatprep.subr.mxu0 0.0
    %2053 = vmatpush1.msra.mxu0 0.0
    %2054 = vmatprep.subr.mxu0 0.0
    %2055 = vmatpush1.msra.mxu0 0.0
    %2056 = vmatprep.subr.mxu0 0.0
    %2057 = vmatpush1.msra.mxu0 0.0
    %2058 = vmatprep.subr.mxu0 0.0
    %2059 = vmatpush1.msra.mxu0 0.0
    %2060 = vmatprep.subr.mxu0 0.0
    %2061 = vmatpush1.msra.mxu0 0.0
    %2062 = vmatprep.subr.mxu0 0.0
    %2063 = vmatpush1.msra.mxu0 0.0
    %2064 = vmatprep.subr.mxu0 0.0
    %2065 = vmatpush1.msra.mxu0 0.0
    %2066 = vmatprep.subr.mxu0 0.0
    %2067 = vmatpush1.msra.mxu0 0.0
    %2068 = vmatprep.subr.mxu0 0.0
    %2069 = vmatpush1.msra.mxu0 0.0
    %2070 = vmatprep.subr.mxu0 0.0
    %2071 = vmatpush1.msra.mxu0 0.0
    %2072 = vmatprep.subr.mxu0 0.0
    %2073 = vmatpush1.msra.mxu0 0.0
    %2074 = vmatprep.subr.mxu0 0.0
    %2075 = vmatpush1.msra.mxu0 0.0
    %2076 = vmatprep.subr.mxu0 0.0
    %2077 = vmatpush1.msra.mxu0 0.0
    %2078 = vmatprep.subr.mxu0 0.0
    %v2079 = vand.u32 %v523, 4294901760
    %v2080 = vsub.f32 %v523, %v2079
    %2081 = vmatpush1.msra.mxu0 %v2080
    %2082 = vmatprep.subr.mxu0 0.0
    %2083 = vmatpush2.msra.mxu0 0.0
    %2084 = vmatprep.subr.mxu0 0.0
    %2085 = vmatpush2.msra.mxu0 0.0
    %2086 = vmatprep.subr.mxu0 0.0
    %2087 = vmatpush2.msra.mxu0 0.0
    %2088 = vmatprep.subr.mxu0 0.0
    %2089 = vmatpush2.msra.mxu0 0.0
    %2090 = vmatprep.subr.mxu0 0.0
    %2091 = vmatpush2.msra.mxu0 0.0
    %2092 = vmatprep.subr.mxu0 0.0
    %2093 = vmatpush2.msra.mxu0 0.0
    %2094 = vmatprep.subr.mxu0 0.0
    %2095 = vmatpush2.msra.mxu0 0.0
    %2096 = vmatprep.subr.mxu0 0.0
    %2097 = vmatpush2.msra.mxu0 0.0
    %2098 = vmatprep.subr.mxu0 0.0
    %2099 = vmatpush2.msra.mxu0 0.0
    %2100 = vmatprep.subr.mxu0 0.0
    %2101 = vmatpush2.msra.mxu0 0.0
    %2102 = vmatprep.subr.mxu0 0.0
    %2103 = vmatpush2.msra.mxu0 0.0
    %2104 = vmatprep.subr.mxu0 0.0
    %2105 = vmatpush2.msra.mxu0 0.0
    %2106 = vmatprep.subr.mxu0 0.0
    %2107 = vmatpush2.msra.mxu0 0.0
    %2108 = vmatprep.subr.mxu0 0.0
    %2109 = vmatpush2.msra.mxu0 0.0
    %2110 = vmatprep.subr.mxu0 0.0
    %2111 = vmatpush2.msra.mxu0 0.0
    %2112 = vmatprep.subr.mxu0 0.0
    %2113 = vmatpush2.msra.mxu0 0.0
    %2114 = vmatprep.mubr.f32.mxu0 0.0
    %v2115 = vand.u32 %v1894, 4294901760
    %v2116 = vsub.f32 %v1894, %v2115
    %2117 = vmatmul.mubr.f32.gmra.mxu0 %v2116
    %v2118 = vpop.f32.mrf.mxu0
    %v2119 = vadd.f32 %v2045, %v2118
    %v2120 = vpop.f32.mrf.mxu0
    %2121 = vdwg.mxu0
    %2122 = vmatprep.subr.mxu0 0.0
    %2123 = vmatpush1.msra.mxu0 0.0
    %2124 = vmatprep.subr.mxu0 0.0
    %2125 = vmatpush1.msra.mxu0 0.0
    %2126 = vmatprep.subr.mxu0 0.0
    %2127 = vmatpush1.msra.mxu0 0.0
    %2128 = vmatprep.subr.mxu0 0.0
    %2129 = vmatpush1.msra.mxu0 0.0
    %2130 = vmatprep.subr.mxu0 0.0
    %2131 = vmatpush1.msra.mxu0 0.0
    %2132 = vmatprep.subr.mxu0 0.0
    %2133 = vmatpush1.msra.mxu0 0.0
    %2134 = vmatprep.subr.mxu0 0.0
    %2135 = vmatpush1.msra.mxu0 0.0
    %2136 = vmatprep.subr.mxu0 0.0
    %2137 = vmatpush1.msra.mxu0 0.0
    %2138 = vmatprep.subr.mxu0 0.0
    %2139 = vmatpush1.msra.mxu0 0.0
    %2140 = vmatprep.subr.mxu0 0.0
    %2141 = vmatpush1.msra.mxu0 0.0
    %2142 = vmatprep.subr.mxu0 0.0
    %2143 = vmatpush1.msra.mxu0 0.0
    %2144 = vmatprep.subr.mxu0 0.0
    %2145 = vmatpush1.msra.mxu0 0.0
    %2146 = vmatprep.subr.mxu0 0.0
    %2147 = vmatpush1.msra.mxu0 0.0
    %2148 = vmatprep.subr.mxu0 0.0
    %2149 = vmatpush1.msra.mxu0 0.0
    %2150 = vmatprep.subr.mxu0 0.0
    %2151 = vmatpush1.msra.mxu0 0.0
    %2152 = vmatprep.subr.mxu0 0.0
    %v2153 = vand.u32 %v523, 4294901760
    %2154 = vmatpush1.msra.mxu0 %v2153
    %2155 = vmatprep.subr.mxu0 0.0
    %2156 = vmatpush2.msra.mxu0 0.0
    %2157 = vmatprep.subr.mxu0 0.0
    %2158 = vmatpush2.msra.mxu0 0.0
    %2159 = vmatprep.subr.mxu0 0.0
    %2160 = vmatpush2.msra.mxu0 0.0
    %2161 = vmatprep.subr.mxu0 0.0
    %2162 = vmatpush2.msra.mxu0 0.0
    %2163 = vmatprep.subr.mxu0 0.0
    %2164 = vmatpush2.msra.mxu0 0.0
    %2165 = vmatprep.subr.mxu0 0.0
    %2166 = vmatpush2.msra.mxu0 0.0
    %2167 = vmatprep.subr.mxu0 0.0
    %2168 = vmatpush2.msra.mxu0 0.0
    %2169 = vmatprep.subr.mxu0 0.0
    %2170 = vmatpush2.msra.mxu0 0.0
    %2171 = vmatprep.subr.mxu0 0.0
    %2172 = vmatpush2.msra.mxu0 0.0
    %2173 = vmatprep.subr.mxu0 0.0
    %2174 = vmatpush2.msra.mxu0 0.0
    %2175 = vmatprep.subr.mxu0 0.0
    %2176 = vmatpush2.msra.mxu0 0.0
    %2177 = vmatprep.subr.mxu0 0.0
    %2178 = vmatpush2.msra.mxu0 0.0
    %2179 = vmatprep.subr.mxu0 0.0
    %2180 = vmatpush2.msra.mxu0 0.0
    %2181 = vmatprep.subr.mxu0 0.0
    %2182 = vmatpush2.msra.mxu0 0.0
    %2183 = vmatprep.subr.mxu0 0.0
    %2184 = vmatpush2.msra.mxu0 0.0
    %2185 = vmatprep.subr.mxu0 0.0
    %2186 = vmatpush2.msra.mxu0 0.0
    %2187 = vmatprep.mubr.f32.mxu0 0.0
    %v2188 = vand.u32 %v1894, 4294901760
    %v2189 = vsub.f32 %v1894, %v2188
    %v2190 = vand.u32 %v2189, 4294901760
    %2191 = vmatmul.mubr.f32.gmra.mxu0 %v2190
    %v2192 = vpop.f32.mrf.mxu0
    %v2193 = vadd.f32 %v2119, %v2192
    %v2194 = vpop.f32.mrf.mxu0
    %2195 = vdwg.mxu0
    %2196 = vmatprep.subr.mxu0 0.0
    %2197 = vmatpush1.msra.mxu0 0.0
    %2198 = vmatprep.subr.mxu0 0.0
    %2199 = vmatpush1.msra.mxu0 0.0
    %2200 = vmatprep.subr.mxu0 0.0
    %2201 = vmatpush1.msra.mxu0 0.0
    %2202 = vmatprep.subr.mxu0 0.0
    %2203 = vmatpush1.msra.mxu0 0.0
    %2204 = vmatprep.subr.mxu0 0.0
    %2205 = vmatpush1.msra.mxu0 0.0
    %2206 = vmatprep.subr.mxu0 0.0
    %2207 = vmatpush1.msra.mxu0 0.0
    %2208 = vmatprep.subr.mxu0 0.0
    %2209 = vmatpush1.msra.mxu0 0.0
    %2210 = vmatprep.subr.mxu0 0.0
    %2211 = vmatpush1.msra.mxu0 0.0
    %2212 = vmatprep.subr.mxu0 0.0
    %2213 = vmatpush1.msra.mxu0 0.0
    %2214 = vmatprep.subr.mxu0 0.0
    %2215 = vmatpush1.msra.mxu0 0.0
    %2216 = vmatprep.subr.mxu0 0.0
    %2217 = vmatpush1.msra.mxu0 0.0
    %2218 = vmatprep.subr.mxu0 0.0
    %2219 = vmatpush1.msra.mxu0 0.0
    %2220 = vmatprep.subr.mxu0 0.0
    %2221 = vmatpush1.msra.mxu0 0.0
    %2222 = vmatprep.subr.mxu0 0.0
    %2223 = vmatpush1.msra.mxu0 0.0
    %2224 = vmatprep.subr.mxu0 0.0
    %2225 = vmatpush1.msra.mxu0 0.0
    %2226 = vmatprep.subr.mxu0 0.0
    %v2227 = vand.u32 %v523, 4294901760
    %v2228 = vsub.f32 %v523, %v2227
    %v2229 = vand.u32 %v2228, 4294901760
    %2230 = vmatpush1.msra.mxu0 %v2229
    %2231 = vmatprep.subr.mxu0 0.0
    %2232 = vmatpush2.msra.mxu0 0.0
    %2233 = vmatprep.subr.mxu0 0.0
    %2234 = vmatpush2.msra.mxu0 0.0
    %2235 = vmatprep.subr.mxu0 0.0
    %2236 = vmatpush2.msra.mxu0 0.0
    %2237 = vmatprep.subr.mxu0 0.0
    %2238 = vmatpush2.msra.mxu0 0.0
    %2239 = vmatprep.subr.mxu0 0.0
    %2240 = vmatpush2.msra.mxu0 0.0
    %2241 = vmatprep.subr.mxu0 0.0
    %2242 = vmatpush2.msra.mxu0 0.0
    %2243 = vmatprep.subr.mxu0 0.0
    %2244 = vmatpush2.msra.mxu0 0.0
    %2245 = vmatprep.subr.mxu0 0.0
    %2246 = vmatpush2.msra.mxu0 0.0
    %2247 = vmatprep.subr.mxu0 0.0
    %2248 = vmatpush2.msra.mxu0 0.0
    %2249 = vmatprep.subr.mxu0 0.0
    %2250 = vmatpush2.msra.mxu0 0.0
    %2251 = vmatprep.subr.mxu0 0.0
    %2252 = vmatpush2.msra.mxu0 0.0
    %2253 = vmatprep.subr.mxu0 0.0
    %2254 = vmatpush2.msra.mxu0 0.0
    %2255 = vmatprep.subr.mxu0 0.0
    %2256 = vmatpush2.msra.mxu0 0.0
    %2257 = vmatprep.subr.mxu0 0.0
    %2258 = vmatpush2.msra.mxu0 0.0
    %2259 = vmatprep.subr.mxu0 0.0
    %2260 = vmatpush2.msra.mxu0 0.0
    %2261 = vmatprep.subr.mxu0 0.0
    %2262 = vmatpush2.msra.mxu0 0.0
    %2263 = vmatprep.mubr.f32.mxu0 0.0
    %v2264 = vand.u32 %v1894, 4294901760
    %2265 = vmatmul.mubr.f32.gmra.mxu0 %v2264
    %v2266 = vpop.f32.mrf.mxu0
    %v2267 = vadd.f32 %v2193, %v2266
    %v2268 = vpop.f32.mrf.mxu0
    %2269 = vdwg.mxu0
    %2270 = vmatprep.subr.mxu0 0.0
    %2271 = vmatpush1.msra.mxu0 0.0
    %2272 = vmatprep.subr.mxu0 0.0
    %2273 = vmatpush1.msra.mxu0 0.0
    %2274 = vmatprep.subr.mxu0 0.0
    %2275 = vmatpush1.msra.mxu0 0.0
    %2276 = vmatprep.subr.mxu0 0.0
    %2277 = vmatpush1.msra.mxu0 0.0
    %2278 = vmatprep.subr.mxu0 0.0
    %2279 = vmatpush1.msra.mxu0 0.0
    %2280 = vmatprep.subr.mxu0 0.0
    %2281 = vmatpush1.msra.mxu0 0.0
    %2282 = vmatprep.subr.mxu0 0.0
    %2283 = vmatpush1.msra.mxu0 0.0
    %2284 = vmatprep.subr.mxu0 0.0
    %2285 = vmatpush1.msra.mxu0 0.0
    %2286 = vmatprep.subr.mxu0 0.0
    %2287 = vmatpush1.msra.mxu0 0.0
    %2288 = vmatprep.subr.mxu0 0.0
    %2289 = vmatpush1.msra.mxu0 0.0
    %2290 = vmatprep.subr.mxu0 0.0
    %2291 = vmatpush1.msra.mxu0 0.0
    %2292 = vmatprep.subr.mxu0 0.0
    %2293 = vmatpush1.msra.mxu0 0.0
    %2294 = vmatprep.subr.mxu0 0.0
    %2295 = vmatpush1.msra.mxu0 0.0
    %2296 = vmatprep.subr.mxu0 0.0
    %2297 = vmatpush1.msra.mxu0 0.0
    %2298 = vmatprep.subr.mxu0 0.0
    %2299 = vmatpush1.msra.mxu0 0.0
    %2300 = vmatprep.subr.mxu0 0.0
    %v2301 = vand.u32 %v523, 4294901760
    %2302 = vmatpush1.msra.mxu0 %v2301
    %2303 = vmatprep.subr.mxu0 0.0
    %2304 = vmatpush2.msra.mxu0 0.0
    %2305 = vmatprep.subr.mxu0 0.0
    %2306 = vmatpush2.msra.mxu0 0.0
    %2307 = vmatprep.subr.mxu0 0.0
    %2308 = vmatpush2.msra.mxu0 0.0
    %2309 = vmatprep.subr.mxu0 0.0
    %2310 = vmatpush2.msra.mxu0 0.0
    %2311 = vmatprep.subr.mxu0 0.0
    %2312 = vmatpush2.msra.mxu0 0.0
    %2313 = vmatprep.subr.mxu0 0.0
    %2314 = vmatpush2.msra.mxu0 0.0
    %2315 = vmatprep.subr.mxu0 0.0
    %2316 = vmatpush2.msra.mxu0 0.0
    %2317 = vmatprep.subr.mxu0 0.0
    %2318 = vmatpush2.msra.mxu0 0.0
    %2319 = vmatprep.subr.mxu0 0.0
    %2320 = vmatpush2.msra.mxu0 0.0
    %2321 = vmatprep.subr.mxu0 0.0
    %2322 = vmatpush2.msra.mxu0 0.0
    %2323 = vmatprep.subr.mxu0 0.0
    %2324 = vmatpush2.msra.mxu0 0.0
    %2325 = vmatprep.subr.mxu0 0.0
    %2326 = vmatpush2.msra.mxu0 0.0
    %2327 = vmatprep.subr.mxu0 0.0
    %2328 = vmatpush2.msra.mxu0 0.0
    %2329 = vmatprep.subr.mxu0 0.0
    %2330 = vmatpush2.msra.mxu0 0.0
    %2331 = vmatprep.subr.mxu0 0.0
    %2332 = vmatpush2.msra.mxu0 0.0
    %2333 = vmatprep.subr.mxu0 0.0
    %2334 = vmatpush2.msra.mxu0 0.0
    %2335 = vmatprep.mubr.f32.mxu0 0.0
    %v2336 = vand.u32 %v1894, 4294901760
    %2337 = vmatmul.mubr.f32.gmra.mxu0 %v2336
    %v2338 = vpop.f32.mrf.mxu0
    %v2339 = vadd.f32 %v2267, %v2338
    %v2340 = vpop.f32.mrf.mxu0
    %2341 = vdwg.mxu0
    %v2342 = vmul.f32 %v971, %v1890
    %v2343 = vlaneseq
    %v2344 = vshrl.u32 %v2343, 7
    %v2345 = vsub.s32 0, %v2344
    %v2346 = vrot.slane %v2339, %v2345
    %v2347 = vadd.f32 %v2342, %v2346
    %vm2348 = vcmask 254976
    %2349 = vst.msk [vmem:[#allocation8] sm:$0x3] %vm2348, %v2347
    %vm2350 = vcmask 25600
    %2351 = vst.msk [vmem:[#allocation9] sm:$0x3] %vm2350, %v516
    %2352 = vst.msk [vmem:[#allocation11] sm:$0x3] %vm2350, %v1432
    // Predicated region
    $region34: #{tpu_custom_call.1} parent=1 // pred_check
      _
    $region35: #{tpu_custom_call.1} parent=1 // pred_check_branch
      %2354 = sbr.rel (0) target = $region37
    $region36: #{tpu_custom_call.1} parent=1 // pred_region
      %s2356 = ssub.s32 32, 32
      %2357 = vsyncadd [#allocation4], %s2356
      %s2359 = sshll.u32 [#allocation8], 4
      %s2360 = int_to_ptr.vmem [resolvable:$true] %s2359
      %2362 = dma.vmem_to_hbm [thread:$0]  %s2360, 32, %s5, [#allocation4]
    $region37: #{tpu_custom_call.1} parent=1 // pred_fallthru
      _
    // Predicated region
    $region38: #{tpu_custom_call.1} parent=1 // pred_check
      _
    $region39: #{tpu_custom_call.1} parent=1 // pred_check_branch
      %2364 = sbr.rel (0) target = $region41
    $region40: #{tpu_custom_call.1} parent=1 // pred_region
      %s2366 = ssub.s32 32, 32
      %2367 = vsyncadd [#allocation10], %s2366
      %s2369 = sshll.u32 [#allocation9], 4
      %s2370 = int_to_ptr.vmem [resolvable:$true] %s2369
      %2372 = dma.vmem_to_hbm [thread:$0]  %s2370, 32, %s6, [#allocation10]
    $region41: #{tpu_custom_call.1} parent=1 // pred_fallthru
      _
    // Predicated region
    $region42: #{tpu_custom_call.1} parent=1 // pred_check
      _
    $region43: #{tpu_custom_call.1} parent=1 // pred_check_branch
      %2374 = sbr.rel (0) target = $region45
    $region44: #{tpu_custom_call.1} parent=1 // pred_region
      %s2376 = ssub.s32 32, 32
      %2377 = vsyncadd [#allocation10], %s2376
      %s2379 = sshll.u32 [#allocation11], 4
      %s2380 = int_to_ptr.vmem [resolvable:$true] %s2379
      %2382 = dma.vmem_to_hbm [thread:$0]  %s2380, 32, %s7, [#allocation10]
    $region45: #{tpu_custom_call.1} parent=1 // pred_fallthru
      _
    // Predicated region
    $region46: #{tpu_custom_call.1} parent=1 // pred_check
      _
    $region47: #{tpu_custom_call.1} parent=1 // pred_check_branch
      %2384 = sbr.rel (0) target = $region49
    $region48: #{tpu_custom_call.1} parent=1 // pred_region
      %2385 = dma.done [#allocation4], 32
    $region49: #{tpu_custom_call.1} parent=1 // pred_fallthru
      _
    // Predicated region
    $region50: #{tpu_custom_call.1} parent=1 // pred_check
      _
    $region51: #{tpu_custom_call.1} parent=1 // pred_check_branch
      %2387 = sbr.rel (0) target = $region53
    $region52: #{tpu_custom_call.1} parent=1 // pred_region
      %2388 = dma.done [#allocation10], 32
    $region53: #{tpu_custom_call.1} parent=1 // pred_fallthru
      _
    // Predicated region
    $region54: #{tpu_custom_call.1} parent=1 // pred_check
      _
    $region55: #{tpu_custom_call.1} parent=1 // pred_check_branch
      %2390 = sbr.rel (0) target = $region57
    $region56: #{tpu_custom_call.1} parent=1 // pred_region
      %2391 = dma.done [#allocation10], 32
    $region57: #{tpu_custom_call.1} parent=1 // pred_fallthru
      _
    %2392 = vsyncpa [#allocation3], 1
    %2393 = vsyncpa [#allocation6], 1
    %2394 = vsyncpa [#allocation4], 1
    %2395 = vsyncpa [#allocation10], 1

</llo_original>
